<compile_context>
chip_gen: v6e
topology: v6e:2x2x1
jax: 0.10.0
libtpu: 0.0.40
codegen_flags: <defaults>
</compile_context>

<pallas_src>
import functools

import jax
import jax.numpy as jnp
from jax.experimental import pallas as pl
from jax.experimental.pallas import tpu as pltpu

C_PAD = 128            # lane-dense output-channel padding for every conv
DEFAULT_TM = 512       # M-tile (rows) for the fused matmul kernel


# ----------------------------------------------------------------------------
# Pallas kernel: fused  out = relu(x @ w + b)
#   x: (tm, K) bf16   w: (K, Npad) bf16   b: (1, Npad) f32   out: (tm, Npad)
# f32 accumulation on the MXU, bias + ReLU in f32, cast on store.
# ----------------------------------------------------------------------------
def _mm_bias_relu_kernel(x_ref, w_ref, b_ref, o_ref):
    acc = jnp.dot(x_ref[...], w_ref[...], preferred_element_type=jnp.float32)
    acc = acc + b_ref[...]
    o_ref[...] = jnp.maximum(acc, 0.0).astype(o_ref.dtype)


def matmul_bias_relu(x, w, b, *, out_dtype, tm=DEFAULT_TM):
    """relu(x @ w + b) with M-tiled grid; w/b stay resident across the grid."""
    M, K = x.shape
    K2, Np = w.shape
    assert K == K2 and Np % 128 == 0 and b.shape == (1, Np)
    x = x.astype(jnp.bfloat16)

    if M <= tm:                       # small M: single full-extent block
        tm_eff, grid_m = M, 1
    else:                             # large M: tile; last block may be partial
        tm_eff, grid_m = tm, pl.cdiv(M, tm)

    out_itemsize = jnp.dtype(out_dtype).itemsize
    cost = pl.CostEstimate(
        flops=2 * M * K * Np,
        transcendentals=0,
        bytes_accessed=(M * K + K * Np) * 2 + Np * 4 + M * Np * out_itemsize,
    )

    return pl.pallas_call(
        _mm_bias_relu_kernel,
        out_shape=jax.ShapeDtypeStruct((M, Np), out_dtype),
        grid=(grid_m,),
        in_specs=[
            pl.BlockSpec((tm_eff, K), lambda i: (i, 0)),   # row tile
            pl.BlockSpec((K, Np), lambda i: (0, 0)),       # resident weights
            pl.BlockSpec((1, Np), lambda i: (0, 0)),       # resident bias
        ],
        out_specs=pl.BlockSpec((tm_eff, Np), lambda i: (i, 0)),
        compiler_params=pltpu.CompilerParams(
            dimension_semantics=("parallel",),             # megacore over M tiles
            vmem_limit_bytes=48 * 1024 * 1024,             # fits v7x's 64 MiB VMEM
        ),
        cost_estimate=cost,
    )(x, w.astype(jnp.bfloat16), b.astype(jnp.float32))


# ----------------------------------------------------------------------------
# im2col glue (pure data movement, runs fused under jit).
# Patch order is (kh, kw, c) to match the (2,3,1,0) weight transpose below.
# `c_in` slices off the zero-padded channels of the previous layer for free.
# ----------------------------------------------------------------------------
def _im2col(x_nhwc, kh, kw, stride, c_in):
    N, H, W, _ = x_nhwc.shape
    oh = (H - kh) // stride + 1
    ow = (W - kw) // stride + 1
    slices = []
    for i in range(kh):
        for j in range(kw):
            slices.append(
                x_nhwc[:, i: i + stride * oh: stride,
                       j: j + stride * ow: stride, :c_in])
    p = jnp.stack(slices, axis=3)                      # (N, oh, ow, kh*kw, c_in)
    return p.reshape(N * oh * ow, kh * kw * c_in), oh, ow


# ----------------------------------------------------------------------------
# One-time parameter preprocessing (hoisted out of the forward path).
# ----------------------------------------------------------------------------
def _conv_out(size, k, s):
    return (size - k) // s + 1


def prepare_params(params, obs_shape):
    """obs_shape = (C, H, W). Returns matmul-layout, padded, bf16 weights."""
    C, H, W = obs_shape
    oh1, ow1 = _conv_out(H, 8, 4), _conv_out(W, 8, 4)
    oh2, ow2 = _conv_out(oh1, 4, 2), _conv_out(ow1, 4, 2)
    oh3, ow3 = _conv_out(oh2, 3, 1), _conv_out(ow2, 3, 1)

    def conv_w(w_oihw):
        oc, ic, kh, kw = w_oihw.shape
        # (OC, IC, KH, KW) -> (KH, KW, IC, OC) -> (KH*KW*IC, OC), pad OC -> 128
        wm = jnp.transpose(w_oihw, (2, 3, 1, 0)).reshape(kh * kw * ic, oc)
        wm = jnp.pad(wm, ((0, 0), (0, C_PAD - oc)))
        return wm.astype(jnp.bfloat16)

    def conv_b(b):
        return jnp.pad(b, (0, C_PAD - b.shape[0])).reshape(1, C_PAD).astype(jnp.float32)

    F, n_flatten = params["wl"].shape
    assert n_flatten == 32 * oh3 * ow3
    F_pad = ((F + 127) // 128) * 128
    # Fold PyTorch's NCHW C-major flatten into a row permutation of wl, and pad
    # the channel dim to C_PAD so the NHWC-padded activation can be flattened
    # directly (no transpose in the forward path).
    wl = params["wl"].reshape(F, 32, oh3, ow3)                        # (F, c, h, w)
    wl = jnp.pad(wl, ((0, F_pad - F), (0, C_PAD - 32), (0, 0), (0, 0)))
    wl = jnp.transpose(wl, (2, 3, 1, 0)).reshape(oh3 * ow3 * C_PAD, F_pad)
    bl = jnp.pad(params["bl"], (0, F_pad - F)).reshape(1, F_pad).astype(jnp.float32)

    return {
        "w1": conv_w(params["w1"]), "b1": conv_b(params["b1"]),
        "w2": conv_w(params["w2"]), "b2": conv_b(params["b2"]),
        "w3": conv_w(params["w3"]), "b3": conv_b(params["b3"]),
        "wl": wl.astype(jnp.bfloat16), "bl": bl,
    }


# ----------------------------------------------------------------------------
# NatureCNN forward (jitted)
# ----------------------------------------------------------------------------
@functools.partial(jax.jit, static_argnames=("features_dim",))
def nature_cnn_forward(prep, obs_nchw, *, features_dim):
    N, C_in = obs_nchw.shape[0], obs_nchw.shape[1]
    x = jnp.transpose(obs_nchw, (0, 2, 3, 1)).astype(jnp.bfloat16)   # NHWC

    def conv_block(x, wm, b, kh, kw, stride, c_in):
        cols, oh, ow = _im2col(x, kh, kw, stride, c_in)
        y = matmul_bias_relu(cols, wm, b, out_dtype=jnp.bfloat16)
        return y.reshape(N, oh, ow, C_PAD)

    x = conv_block(x, prep["w1"], prep["b1"], 8, 8, 4, C_in)   # Conv(C,32,8,4)+ReLU
    x = conv_block(x, prep["w2"], prep["b2"], 4, 4, 2, 32)     # Conv(32,64,4,2)+ReLU
    x = conv_block(x, prep["w3"], prep["b3"], 3, 3, 1, 64)     # Conv(64,32,3,1)+ReLU

    # NHWC-padded flatten; the NCHW C-major flatten order of PyTorch is folded
    # into the pre-permuted linear weight, so no transpose is needed here.
    flat = x.reshape(N, -1)
    out = matmul_bias_relu(flat, prep["wl"], prep["bl"], out_dtype=jnp.float32)
    return out[:, :features_dim]


# ----------------------------------------------------------------------------
# Deterministic synthetic parameters (shapes implied by the module __init__)
# ----------------------------------------------------------------------------
def init_params(key, n_input_channels, n_flatten, features_dim):
    ks = jax.random.split(key, 8)
    s = 0.05
    return {
        "w1": s * jax.random.normal(ks[0], (32, n_input_channels, 8, 8), jnp.float32),
        "b1": s * jax.random.normal(ks[1], (32,), jnp.float32),
        "w2": s * jax.random.normal(ks[2], (64, 32, 4, 4), jnp.float32),
        "b2": s * jax.random.normal(ks[3], (64,), jnp.float32),
        "w3": s * jax.random.normal(ks[4], (32, 64, 3, 3), jnp.float32),
        "b3": s * jax.random.normal(ks[5], (32,), jnp.float32),
        "wl": s * jax.random.normal(ks[6], (features_dim, n_flatten), jnp.float32),
        "bl": s * jax.random.normal(ks[7], (features_dim,), jnp.float32),
    }


# ----------------------------------------------------------------------------
# Precision-matched pure-JAX reference (lax conv, bf16 operands, f32 accum)
# ----------------------------------------------------------------------------
def reference_forward(params, obs_nchw):
    def conv(x, w, b, stride):
        y = jax.lax.conv_general_dilated(
            x.astype(jnp.bfloat16), w.astype(jnp.bfloat16),
            window_strides=(stride, stride), padding="VALID",
            dimension_numbers=("NCHW", "OIHW", "NCHW"),
            preferred_element_type=jnp.float32)
        return jax.nn.relu(y + b[None, :, None, None].astype(jnp.float32))

    x = obs_nchw.astype(jnp.float32)
    x = conv(x, params["w1"], params["b1"], 4)
    x = conv(x, params["w2"], params["b2"], 2)
    x = conv(x, params["w3"], params["b3"], 1)
    flat = x.reshape(x.shape[0], -1)
    y = jnp.dot(flat.astype(jnp.bfloat16), params["wl"].T.astype(jnp.bfloat16),
                preferred_element_type=jnp.float32) + params["bl"]
    return jax.nn.relu(y)


if __name__ == "__main__":
    # Small image shape consistent with the conv chain:
    # H=W=36 -> conv(8,4): 8 -> conv(4,2): 3 -> conv(3,1): 1 ; n_flatten = 32
    batch, n_ch, hw = 2, 4, 36
    features_dim = 128
    n_flatten = 32 * 1 * 1

    key = jax.random.PRNGKey(0)
    k_obs, k_par = jax.random.split(key)
    obs = jax.random.uniform(k_obs, (batch, n_ch, hw, hw), jnp.float32) * 255.0
    params = init_params(k_par, n_ch, n_flatten, features_dim)

    prep = prepare_params(params, (n_ch, hw, hw))          # one-time weight prep
    out = nature_cnn_forward(prep, obs, features_dim=features_dim)
    out = jax.block_until_ready(out)
    assert out.shape == (batch, features_dim), out.shape

    ref = jax.block_until_ready(reference_forward(params, obs))
    assert jnp.allclose(out, ref, atol=1e-2, rtol=1e-2), \
        float(jnp.max(jnp.abs(out - ref)))

    print("KERNEL_OK")
</pallas_src>

<mosaic_0001>
module attributes {stable_mosaic.version = 11 : i64} {
  func.func @_mm_bias_relu_kernel(%arg0: i32, %arg1: memref<128x256xbf16, #tpu.memory_space<vmem>>, %arg2: memref<256x128xbf16, #tpu.memory_space<vmem>>, %arg3: memref<1x128xf32, #tpu.memory_space<vmem>>, %arg4: memref<128x128xbf16, #tpu.memory_space<vmem>>) attributes {dimension_semantics = [#tpu.dimension_semantics<parallel>], iteration_bounds = array<i64: 1>, scalar_prefetch = 0 : i64, scratch_operands = 0 : i64, tpu.core_type = #tpu.core_type<tc>, window_params = [{transform_indices = @transform_0, window_bounds = array<i64: 128, 256>}, {pipeline_mode = #tpu.pipeline_mode<synchronous>, transform_indices = @transform_1, window_bounds = array<i64: 256, 128>}, {pipeline_mode = #tpu.pipeline_mode<synchronous>, transform_indices = @transform_2, window_bounds = array<i64: 1, 128>}, {transform_indices = @transform_3, window_bounds = array<i64: 128, 128>}]} {
    %c0 = arith.constant 0 : index
    %c0_0 = arith.constant 0 : index
    %0 = vector.load %arg1[%c0, %c0_0] : memref<128x256xbf16, #tpu.memory_space<vmem>>, vector<128x256xbf16>
    %c0_1 = arith.constant 0 : index
    %c0_2 = arith.constant 0 : index
    %1 = vector.load %arg2[%c0_1, %c0_2] : memref<256x128xbf16, #tpu.memory_space<vmem>>, vector<256x128xbf16>
    %cst = arith.constant dense<0.000000e+00> : vector<128x128xf32>
    %2 = tpu.matmul %0, %1, %cst {dimension_numbers = #tpu.dot_dimension_numbers<[1], [0], [0], [1], [0, 0, 1, 1], [], []>} : vector<128x256xbf16>, vector<256x128xbf16>, vector<128x128xf32> -> vector<128x128xf32>
    %c0_3 = arith.constant 0 : index
    %c0_4 = arith.constant 0 : index
    %3 = vector.load %arg3[%c0_3, %c0_4] : memref<1x128xf32, #tpu.memory_space<vmem>>, vector<1x128xf32>
    %4 = vector.broadcast %3 : vector<1x128xf32> to vector<128x128xf32>
    %5 = arith.addf %2, %4 : vector<128x128xf32>
    %cst_5 = arith.constant 0.000000e+00 : f32
    %6 = vector.broadcast %cst_5 : f32 to vector<128x128xf32>
    %7 = arith.maximumf %5, %6 : vector<128x128xf32>
    %8 = arith.truncf %7 : vector<128x128xf32> to vector<128x128xbf16>
    %c0_6 = arith.constant 0 : index
    %c0_7 = arith.constant 0 : index
    %9 = vector.load %arg4[%c0_6, %c0_7] : memref<128x128xbf16, #tpu.memory_space<vmem>>, vector<128x128xbf16>
    tpu.vector_store %arg4[%c0_6, %c0_7], %8 {strides = array<i32>} : memref<128x128xbf16, #tpu.memory_space<vmem>>, vector<128x128xbf16>,
    return
  }
  func.func @transform_0(%arg0: i32) -> (i32, i32) {
    %c0_i32 = arith.constant 0 : i32
    %c0_i32_0 = arith.constant 0 : i32
    return %arg0, %c0_i32 : i32, i32
  }
  func.func @transform_1(%arg0: i32) -> (i32, i32) {
    %c0_i32 = arith.constant 0 : i32
    %c0_i32_0 = arith.constant 0 : i32
    %c0_i32_1 = arith.constant 0 : i32
    return %c0_i32, %c0_i32_0 : i32, i32
  }
  func.func @transform_2(%arg0: i32) -> (i32, i32) {
    %c0_i32 = arith.constant 0 : i32
    %c0_i32_0 = arith.constant 0 : i32
    %c0_i32_1 = arith.constant 0 : i32
    return %c0_i32, %c0_i32_0 : i32, i32
  }
  func.func @transform_3(%arg0: i32) -> (i32, i32) {
    %c0_i32 = arith.constant 0 : i32
    %c0_i32_0 = arith.constant 0 : i32
    return %arg0, %c0_i32 : i32, i32
  }
}

module attributes {stable_mosaic.version = 11 : i64} {
  func.func @_mm_bias_relu_kernel(%arg0: i32, %arg1: memref<18x512xbf16, #tpu.memory_space<vmem>>, %arg2: memref<512x128xbf16, #tpu.memory_space<vmem>>, %arg3: memref<1x128xf32, #tpu.memory_space<vmem>>, %arg4: memref<18x128xbf16, #tpu.memory_space<vmem>>) attributes {dimension_semantics = [#tpu.dimension_semantics<parallel>], iteration_bounds = array<i64: 1>, scalar_prefetch = 0 : i64, scratch_operands = 0 : i64, tpu.core_type = #tpu.core_type<tc>, window_params = [{transform_indices = @transform_0, window_bounds = array<i64: 18, 512>}, {pipeline_mode = #tpu.pipeline_mode<synchronous>, transform_indices = @transform_1, window_bounds = array<i64: 512, 128>}, {pipeline_mode = #tpu.pipeline_mode<synchronous>, transform_indices = @transform_2, window_bounds = array<i64: 1, 128>}, {transform_indices = @transform_3, window_bounds = array<i64: 18, 128>}]} {
    %c0 = arith.constant 0 : index
    %c0_0 = arith.constant 0 : index
    %0 = vector.load %arg1[%c0, %c0_0] : memref<18x512xbf16, #tpu.memory_space<vmem>>, vector<18x512xbf16>
    %c0_1 = arith.constant 0 : index
    %c0_2 = arith.constant 0 : index
    %1 = vector.load %arg2[%c0_1, %c0_2] : memref<512x128xbf16, #tpu.memory_space<vmem>>, vector<512x128xbf16>
    %cst = arith.constant dense<0.000000e+00> : vector<18x128xf32>
    %2 = tpu.matmul %0, %1, %cst {dimension_numbers = #tpu.dot_dimension_numbers<[1], [0], [0], [1], [0, 0, 1, 1], [], []>} : vector<18x512xbf16>, vector<512x128xbf16>, vector<18x128xf32> -> vector<18x128xf32>
    %c0_3 = arith.constant 0 : index
    %c0_4 = arith.constant 0 : index
    %3 = vector.load %arg3[%c0_3, %c0_4] : memref<1x128xf32, #tpu.memory_space<vmem>>, vector<1x128xf32>
    %4 = vector.broadcast %3 : vector<1x128xf32> to vector<18x128xf32>
    %5 = arith.addf %2, %4 : vector<18x128xf32>
    %cst_5 = arith.constant 0.000000e+00 : f32
    %6 = vector.broadcast %cst_5 : f32 to vector<18x128xf32>
    %7 = arith.maximumf %5, %6 : vector<18x128xf32>
    %8 = arith.truncf %7 : vector<18x128xf32> to vector<18x128xbf16>
    %c0_6 = arith.constant 0 : index
    %c0_7 = arith.constant 0 : index
    %9 = vector.load %arg4[%c0_6, %c0_7] : memref<18x128xbf16, #tpu.memory_space<vmem>>, vector<18x128xbf16>
    tpu.vector_store %arg4[%c0_6, %c0_7], %8 {strides = array<i32>} : memref<18x128xbf16, #tpu.memory_space<vmem>>, vector<18x128xbf16>,
    return
  }
  func.func @transform_0(%arg0: i32) -> (i32, i32) {
    %c0_i32 = arith.constant 0 : i32
    %c0_i32_0 = arith.constant 0 : i32
    return %arg0, %c0_i32 : i32, i32
  }
  func.func @transform_1(%arg0: i32) -> (i32, i32) {
    %c0_i32 = arith.constant 0 : i32
    %c0_i32_0 = arith.constant 0 : i32
    %c0_i32_1 = arith.constant 0 : i32
    return %c0_i32, %c0_i32_0 : i32, i32
  }
  func.func @transform_2(%arg0: i32) -> (i32, i32) {
    %c0_i32 = arith.constant 0 : i32
    %c0_i32_0 = arith.constant 0 : i32
    %c0_i32_1 = arith.constant 0 : i32
    return %c0_i32, %c0_i32_0 : i32, i32
  }
  func.func @transform_3(%arg0: i32) -> (i32, i32) {
    %c0_i32 = arith.constant 0 : i32
    %c0_i32_0 = arith.constant 0 : i32
    return %arg0, %c0_i32 : i32, i32
  }
}

module attributes {stable_mosaic.version = 11 : i64} {
  func.func @_mm_bias_relu_kernel(%arg0: i32, %arg1: memref<2x576xbf16, #tpu.memory_space<vmem>>, %arg2: memref<576x128xbf16, #tpu.memory_space<vmem>>, %arg3: memref<1x128xf32, #tpu.memory_space<vmem>>, %arg4: memref<2x128xbf16, #tpu.memory_space<vmem>>) attributes {dimension_semantics = [#tpu.dimension_semantics<parallel>], iteration_bounds = array<i64: 1>, scalar_prefetch = 0 : i64, scratch_operands = 0 : i64, tpu.core_type = #tpu.core_type<tc>, window_params = [{transform_indices = @transform_0, window_bounds = array<i64: 2, 576>}, {pipeline_mode = #tpu.pipeline_mode<synchronous>, transform_indices = @transform_1, window_bounds = array<i64: 576, 128>}, {pipeline_mode = #tpu.pipeline_mode<synchronous>, transform_indices = @transform_2, window_bounds = array<i64: 1, 128>}, {transform_indices = @transform_3, window_bounds = array<i64: 2, 128>}]} {
    %c0 = arith.constant 0 : index
    %c0_0 = arith.constant 0 : index
    %0 = vector.load %arg1[%c0, %c0_0] : memref<2x576xbf16, #tpu.memory_space<vmem>>, vector<2x576xbf16>
    %c0_1 = arith.constant 0 : index
    %c0_2 = arith.constant 0 : index
    %1 = vector.load %arg2[%c0_1, %c0_2] : memref<576x128xbf16, #tpu.memory_space<vmem>>, vector<576x128xbf16>
    %cst = arith.constant dense<0.000000e+00> : vector<2x128xf32>
    %2 = tpu.matmul %0, %1, %cst {dimension_numbers = #tpu.dot_dimension_numbers<[1], [0], [0], [1], [0, 0, 1, 1], [], []>} : vector<2x576xbf16>, vector<576x128xbf16>, vector<2x128xf32> -> vector<2x128xf32>
    %c0_3 = arith.constant 0 : index
    %c0_4 = arith.constant 0 : index
    %3 = vector.load %arg3[%c0_3, %c0_4] : memref<1x128xf32, #tpu.memory_space<vmem>>, vector<1x128xf32>
    %4 = vector.broadcast %3 : vector<1x128xf32> to vector<2x128xf32>
    %5 = arith.addf %2, %4 : vector<2x128xf32>
    %cst_5 = arith.constant 0.000000e+00 : f32
    %6 = vector.broadcast %cst_5 : f32 to vector<2x128xf32>
    %7 = arith.maximumf %5, %6 : vector<2x128xf32>
    %8 = arith.truncf %7 : vector<2x128xf32> to vector<2x128xbf16>
    %c0_6 = arith.constant 0 : index
    %c0_7 = arith.constant 0 : index
    %9 = vector.load %arg4[%c0_6, %c0_7] : memref<2x128xbf16, #tpu.memory_space<vmem>>, vector<2x128xbf16>
    tpu.vector_store %arg4[%c0_6, %c0_7], %8 {strides = array<i32>} : memref<2x128xbf16, #tpu.memory_space<vmem>>, vector<2x128xbf16>,
    return
  }
  func.func @transform_0(%arg0: i32) -> (i32, i32) {
    %c0_i32 = arith.constant 0 : i32
    %c0_i32_0 = arith.constant 0 : i32
    return %arg0, %c0_i32 : i32, i32
  }
  func.func @transform_1(%arg0: i32) -> (i32, i32) {
    %c0_i32 = arith.constant 0 : i32
    %c0_i32_0 = arith.constant 0 : i32
    %c0_i32_1 = arith.constant 0 : i32
    return %c0_i32, %c0_i32_0 : i32, i32
  }
  func.func @transform_2(%arg0: i32) -> (i32, i32) {
    %c0_i32 = arith.constant 0 : i32
    %c0_i32_0 = arith.constant 0 : i32
    %c0_i32_1 = arith.constant 0 : i32
    return %c0_i32, %c0_i32_0 : i32, i32
  }
  func.func @transform_3(%arg0: i32) -> (i32, i32) {
    %c0_i32 = arith.constant 0 : i32
    %c0_i32_0 = arith.constant 0 : i32
    return %arg0, %c0_i32 : i32, i32
  }
}

module attributes {stable_mosaic.version = 11 : i64} {
  func.func @_mm_bias_relu_kernel(%arg0: i32, %arg1: memref<2x128xbf16, #tpu.memory_space<vmem>>, %arg2: memref<128x128xbf16, #tpu.memory_space<vmem>>, %arg3: memref<1x128xf32, #tpu.memory_space<vmem>>, %arg4: memref<2x128xf32, #tpu.memory_space<vmem>>) attributes {dimension_semantics = [#tpu.dimension_semantics<parallel>], iteration_bounds = array<i64: 1>, scalar_prefetch = 0 : i64, scratch_operands = 0 : i64, tpu.core_type = #tpu.core_type<tc>, window_params = [{transform_indices = @transform_0, window_bounds = array<i64: 2, 128>}, {pipeline_mode = #tpu.pipeline_mode<synchronous>, transform_indices = @transform_1, window_bounds = array<i64: 128, 128>}, {pipeline_mode = #tpu.pipeline_mode<synchronous>, transform_indices = @transform_2, window_bounds = array<i64: 1, 128>}, {transform_indices = @transform_3, window_bounds = array<i64: 2, 128>}]} {
    %c0 = arith.constant 0 : index
    %c0_0 = arith.constant 0 : index
    %0 = vector.load %arg1[%c0, %c0_0] : memref<2x128xbf16, #tpu.memory_space<vmem>>, vector<2x128xbf16>
    %c0_1 = arith.constant 0 : index
    %c0_2 = arith.constant 0 : index
    %1 = vector.load %arg2[%c0_1, %c0_2] : memref<128x128xbf16, #tpu.memory_space<vmem>>, vector<128x128xbf16>
    %cst = arith.constant dense<0.000000e+00> : vector<2x128xf32>
    %2 = tpu.matmul %0, %1, %cst {dimension_numbers = #tpu.dot_dimension_numbers<[1], [0], [0], [1], [0, 0, 1, 1], [], []>} : vector<2x128xbf16>, vector<128x128xbf16>, vector<2x128xf32> -> vector<2x128xf32>
    %c0_3 = arith.constant 0 : index
    %c0_4 = arith.constant 0 : index
    %3 = vector.load %arg3[%c0_3, %c0_4] : memref<1x128xf32, #tpu.memory_space<vmem>>, vector<1x128xf32>
    %4 = vector.broadcast %3 : vector<1x128xf32> to vector<2x128xf32>
    %5 = arith.addf %2, %4 : vector<2x128xf32>
    %cst_5 = arith.constant 0.000000e+00 : f32
    %6 = vector.broadcast %cst_5 : f32 to vector<2x128xf32>
    %7 = arith.maximumf %5, %6 : vector<2x128xf32>
    %c0_6 = arith.constant 0 : index
    %c0_7 = arith.constant 0 : index
    %8 = vector.load %arg4[%c0_6, %c0_7] : memref<2x128xf32, #tpu.memory_space<vmem>>, vector<2x128xf32>
    tpu.vector_store %arg4[%c0_6, %c0_7], %7 {strides = array<i32>} : memref<2x128xf32, #tpu.memory_space<vmem>>, vector<2x128xf32>,
    return
  }
  func.func @transform_0(%arg0: i32) -> (i32, i32) {
    %c0_i32 = arith.constant 0 : i32
    %c0_i32_0 = arith.constant 0 : i32
    return %arg0, %c0_i32 : i32, i32
  }
  func.func @transform_1(%arg0: i32) -> (i32, i32) {
    %c0_i32 = arith.constant 0 : i32
    %c0_i32_0 = arith.constant 0 : i32
    %c0_i32_1 = arith.constant 0 : i32
    return %c0_i32, %c0_i32_0 : i32, i32
  }
  func.func @transform_2(%arg0: i32) -> (i32, i32) {
    %c0_i32 = arith.constant 0 : i32
    %c0_i32_0 = arith.constant 0 : i32
    %c0_i32_1 = arith.constant 0 : i32
    return %c0_i32, %c0_i32_0 : i32, i32
  }
  func.func @transform_3(%arg0: i32) -> (i32, i32) {
    %c0_i32 = arith.constant 0 : i32
    %c0_i32_0 = arith.constant 0 : i32
    return %arg0, %c0_i32 : i32, i32
  }
}

</mosaic_0001>

<llo_original>
// kernel: nature_cnn_forward.4
$region0: #{nature_cnn_forward.4}
  #allocation0 [shape = 'u32[]', space=smem, size = 0x4, offset = 0x4, fixed_abs, tag = 'smem constant byte address 0x4 - core index']
  #allocation1 [shape = 'u32[144,128]{1,0:T(1,128)}', space=vmem, size = 0x12000, scoped, tag = 'internal scratch']
  %s0 = inlined_call_operand.vmem [shape: bf16[128,256], index: 0, kind: input, shape index: {}]
  %s1 = inlined_call_operand.vmem [shape: bf16[256,128], index: 1, kind: input, shape index: {}]
  %s2 = inlined_call_operand.vmem [shape: f32[1,128], index: 2, kind: input, shape index: {}]
  %s3 = inlined_call_operand.vmem [shape: bf16[128,128], index: 3, kind: output, shape index: {}]
  %s4 = sld [smem:[#allocation0]]
  $region22: #{nature_cnn_forward.4} parent=0
    _
  %s6 = ssub.s32 1, %s4
  %s7 = scalar_select 0, %s6, %s4
  // Predicated region
  $region2: #{nature_cnn_forward.4} parent=0 // pred_check
    _
  $region3: #{nature_cnn_forward.4} parent=0 // pred_check_branch
    %9 = sbr.rel (0) target = $region5
  $region4: #{nature_cnn_forward.4} parent=0 // pred_region
    _
  $region5: #{nature_cnn_forward.4} parent=0 // pred_fallthru
    _
  // Predicated region
  $region6: #{nature_cnn_forward.4} parent=0 // pred_check
    _
  $region7: #{nature_cnn_forward.4} parent=0 // pred_check_branch
    %11 = sbr.rel (0) target = $region9
  $region8: #{nature_cnn_forward.4} parent=0 // pred_region
    _
  $region9: #{nature_cnn_forward.4} parent=0 // pred_fallthru
    _
  // Predicated region
  $region10: #{nature_cnn_forward.4} parent=0 // pred_check
    _
  $region11: #{nature_cnn_forward.4} parent=0 // pred_check_branch
    %13 = sbr.rel (0) target = $region13
  $region12: #{nature_cnn_forward.4} parent=0 // pred_region
    _
  $region13: #{nature_cnn_forward.4} parent=0 // pred_fallthru
    _
  %v15 = vld [vmem:[%s0] sm:$0xff]
  %v16 = vld [vmem:[%s0 + $0x8] sm:$0xff]
  %v17 = vld [vmem:[%s0 + $0x10] sm:$0xff]
  %v18 = vld [vmem:[%s0 + $0x18] sm:$0xff]
  %v19 = vld [vmem:[%s0 + $0x20] sm:$0xff]
  %v20 = vld [vmem:[%s0 + $0x28] sm:$0xff]
  %v21 = vld [vmem:[%s0 + $0x30] sm:$0xff]
  %v22 = vld [vmem:[%s0 + $0x38] sm:$0xff]
  %v23 = vld [vmem:[%s0 + $0x40] sm:$0xff]
  %v24 = vld [vmem:[%s0 + $0x48] sm:$0xff]
  %v25 = vld [vmem:[%s0 + $0x50] sm:$0xff]
  %v26 = vld [vmem:[%s0 + $0x58] sm:$0xff]
  %v27 = vld [vmem:[%s0 + $0x60] sm:$0xff]
  %v28 = vld [vmem:[%s0 + $0x68] sm:$0xff]
  %v29 = vld [vmem:[%s0 + $0x70] sm:$0xff]
  %v30 = vld [vmem:[%s0 + $0x78] sm:$0xff]
  %v31 = vld [vmem:[%s1] sm:$0xf]
  %v32 = vld [vmem:[%s1 + $0x4] sm:$0xf]
  %v33 = vld [vmem:[%s1 + $0x8] sm:$0xf]
  %v34 = vld [vmem:[%s1 + $0xc] sm:$0xf]
  %v35 = vld [vmem:[%s1 + $0x10] sm:$0xf]
  %v36 = vld [vmem:[%s1 + $0x14] sm:$0xf]
  %v37 = vld [vmem:[%s1 + $0x18] sm:$0xf]
  %v38 = vld [vmem:[%s1 + $0x1c] sm:$0xf]
  %v39 = vld [vmem:[%s1 + $0x20] sm:$0xf]
  %v40 = vld [vmem:[%s1 + $0x24] sm:$0xf]
  %v41 = vld [vmem:[%s1 + $0x28] sm:$0xf]
  %v42 = vld [vmem:[%s1 + $0x2c] sm:$0xf]
  %v43 = vld [vmem:[%s1 + $0x30] sm:$0xf]
  %v44 = vld [vmem:[%s1 + $0x34] sm:$0xf]
  %v45 = vld [vmem:[%s1 + $0x38] sm:$0xf]
  %v46 = vld [vmem:[%s1 + $0x3c] sm:$0xf]
  %v47 = vld [vmem:[%s1 + $0x40] sm:$0xf]
  %v48 = vld [vmem:[%s1 + $0x44] sm:$0xf]
  %v49 = vld [vmem:[%s1 + $0x48] sm:$0xf]
  %v50 = vld [vmem:[%s1 + $0x4c] sm:$0xf]
  %v51 = vld [vmem:[%s1 + $0x50] sm:$0xf]
  %v52 = vld [vmem:[%s1 + $0x54] sm:$0xf]
  %v53 = vld [vmem:[%s1 + $0x58] sm:$0xf]
  %v54 = vld [vmem:[%s1 + $0x5c] sm:$0xf]
  %v55 = vld [vmem:[%s1 + $0x60] sm:$0xf]
  %v56 = vld [vmem:[%s1 + $0x64] sm:$0xf]
  %v57 = vld [vmem:[%s1 + $0x68] sm:$0xf]
  %v58 = vld [vmem:[%s1 + $0x6c] sm:$0xf]
  %v59 = vld [vmem:[%s1 + $0x70] sm:$0xf]
  %v60 = vld [vmem:[%s1 + $0x74] sm:$0xf]
  %v61 = vld [vmem:[%s1 + $0x78] sm:$0xf]
  %v62 = vld [vmem:[%s1 + $0x7c] sm:$0xf]
  %v63 = vld [vmem:[%s2] sm:$0x1]
  %v65 = vlaneseq
  %v66 = vshrl.u32 %v65, 7
  %v67 = vsub.s32 0, %v66
  %v68 = vrot.slane %v63, %v67
  %v86 = vunpack.c.l.b16 %v15
  %v87 = vunpack.c.h.b16 %v15
  %v88 = vunpack.c.l.b16 %v16
  %v89 = vunpack.c.h.b16 %v16
  %v90 = vunpack.c.l.b16 %v17
  %v91 = vunpack.c.h.b16 %v17
  %v92 = vunpack.c.l.b16 %v18
  %v93 = vunpack.c.h.b16 %v18
  %v94 = vunpack.c.l.b16 %v19
  %v95 = vunpack.c.h.b16 %v19
  %v96 = vunpack.c.l.b16 %v20
  %v97 = vunpack.c.h.b16 %v20
  %v98 = vunpack.c.l.b16 %v21
  %v99 = vunpack.c.h.b16 %v21
  %v100 = vunpack.c.l.b16 %v22
  %v101 = vunpack.c.h.b16 %v22
  %v102 = vunpack.c.l.b16 %v23
  %v103 = vunpack.c.h.b16 %v23
  %v104 = vunpack.c.l.b16 %v24
  %v105 = vunpack.c.h.b16 %v24
  %v106 = vunpack.c.l.b16 %v25
  %v107 = vunpack.c.h.b16 %v25
  %v108 = vunpack.c.l.b16 %v26
  %v109 = vunpack.c.h.b16 %v26
  %v110 = vunpack.c.l.b16 %v27
  %v111 = vunpack.c.h.b16 %v27
  %v112 = vunpack.c.l.b16 %v28
  %v113 = vunpack.c.h.b16 %v28
  %v114 = vunpack.c.l.b16 %v29
  %v115 = vunpack.c.h.b16 %v29
  %v116 = vunpack.c.l.b16 %v30
  %v117 = vunpack.c.h.b16 %v30
  %v118 = vpack.c.b16 %v88, %v86
  %v119 = vpack.c.b16 %v89, %v87
  %v120 = vpack.c.b16 %v92, %v90
  %v121 = vpack.c.b16 %v93, %v91
  %v122 = vpack.c.b16 %v96, %v94
  %v123 = vpack.c.b16 %v97, %v95
  %v124 = vpack.c.b16 %v100, %v98
  %v125 = vpack.c.b16 %v101, %v99
  %v126 = vpack.c.b16 %v104, %v102
  %v127 = vpack.c.b16 %v105, %v103
  %v128 = vpack.c.b16 %v108, %v106
  %v129 = vpack.c.b16 %v109, %v107
  %v130 = vpack.c.b16 %v112, %v110
  %v131 = vpack.c.b16 %v113, %v111
  %v132 = vpack.c.b16 %v116, %v114
  %v133 = vpack.c.b16 %v117, %v115
  %v182 = vunpack.c.l.b16 %v31
  %v183 = vunpack.c.l.b16 %v32
  %v184 = vunpack.c.l.b16 %v33
  %v185 = vunpack.c.l.b16 %v34
  %v186 = vunpack.c.l.b16 %v35
  %v187 = vunpack.c.l.b16 %v36
  %v188 = vunpack.c.l.b16 %v37
  %v189 = vunpack.c.l.b16 %v38
  %v190 = vunpack.c.l.b16 %v39
  %v191 = vunpack.c.l.b16 %v40
  %v192 = vunpack.c.l.b16 %v41
  %v193 = vunpack.c.l.b16 %v42
  %v194 = vunpack.c.l.b16 %v43
  %v195 = vunpack.c.l.b16 %v44
  %v196 = vunpack.c.l.b16 %v45
  %v197 = vunpack.c.l.b16 %v46
  %v198 = vunpack.c.l.b16 %v47
  %v199 = vunpack.c.l.b16 %v48
  %v200 = vunpack.c.l.b16 %v49
  %v201 = vunpack.c.l.b16 %v50
  %v202 = vunpack.c.l.b16 %v51
  %v203 = vunpack.c.l.b16 %v52
  %v204 = vunpack.c.l.b16 %v53
  %v205 = vunpack.c.l.b16 %v54
  %v206 = vunpack.c.l.b16 %v55
  %v207 = vunpack.c.l.b16 %v56
  %v208 = vunpack.c.l.b16 %v57
  %v209 = vunpack.c.l.b16 %v58
  %v210 = vunpack.c.l.b16 %v59
  %v211 = vunpack.c.l.b16 %v60
  %v212 = vunpack.c.l.b16 %v61
  %v213 = vunpack.c.l.b16 %v62
  %v214 = vpack.c.b16 %v183, %v182
  %v215 = vpack.c.b16 %v185, %v184
  %v216 = vpack.c.b16 %v187, %v186
  %v217 = vpack.c.b16 %v189, %v188
  %v218 = vpack.c.b16 %v191, %v190
  %v219 = vpack.c.b16 %v193, %v192
  %v220 = vpack.c.b16 %v195, %v194
  %v221 = vpack.c.b16 %v197, %v196
  %v222 = vpack.c.b16 %v199, %v198
  %v223 = vpack.c.b16 %v201, %v200
  %v224 = vpack.c.b16 %v203, %v202
  %v225 = vpack.c.b16 %v205, %v204
  %v226 = vpack.c.b16 %v207, %v206
  %v227 = vpack.c.b16 %v209, %v208
  %v228 = vpack.c.b16 %v211, %v210
  %v229 = vpack.c.b16 %v213, %v212
  %246 = vmatprep.subr.bf16.mxu0 0
  %247 = vmatpush1.bf16.msra.mxu0 %v221
  %248 = vmatprep.subr.bf16.mxu0 0
  %249 = vmatpush1.bf16.msra.mxu0 %v220
  %250 = vmatprep.subr.bf16.mxu0 0
  %251 = vmatpush1.bf16.msra.mxu0 %v219
  %252 = vmatprep.subr.bf16.mxu0 0
  %253 = vmatpush1.bf16.msra.mxu0 %v218
  %254 = vmatprep.subr.bf16.mxu0 0
  %255 = vmatpush1.bf16.msra.mxu0 %v217
  %256 = vmatprep.subr.bf16.mxu0 0
  %257 = vmatpush1.bf16.msra.mxu0 %v216
  %258 = vmatprep.subr.bf16.mxu0 0
  %259 = vmatpush1.bf16.msra.mxu0 %v215
  %260 = vmatprep.subr.bf16.mxu0 0
  %261 = vmatpush1.bf16.msra.mxu0 %v214
  %262 = vmatprep.subr.bf16.mxu0 0
  %263 = vmatpush2.bf16.msra.mxu0 %v229
  %264 = vmatprep.subr.bf16.mxu0 0
  %265 = vmatpush2.bf16.msra.mxu0 %v228
  %266 = vmatprep.subr.bf16.mxu0 0
  %267 = vmatpush2.bf16.msra.mxu0 %v227
  %268 = vmatprep.subr.bf16.mxu0 0
  %269 = vmatpush2.bf16.msra.mxu0 %v226
  %270 = vmatprep.subr.bf16.mxu0 0
  %271 = vmatpush2.bf16.msra.mxu0 %v225
  %272 = vmatprep.subr.bf16.mxu0 0
  %273 = vmatpush2.bf16.msra.mxu0 %v224
  %274 = vmatprep.subr.bf16.mxu0 0
  %275 = vmatpush2.bf16.msra.mxu0 %v223
  %276 = vmatprep.subr.bf16.mxu0 0
  %277 = vmatpush2.bf16.msra.mxu0 %v222
  %278 = vmatprep.mubr.bf16.mxu0 %v119
  %279 = vmatmul.mubr.bf16.gmra.mxu0 %v118
  %v280 = vpop.f32.mrf.mxu0
  %v281 = vadd.f32 %v68, %v280
  %v282 = vpop.f32.mrf.mxu0
  %v283 = vpop.f32.mrf.mxu0
  %v284 = vadd.f32 %v68, %v283
  %v285 = vpop.f32.mrf.mxu0
  %286 = vmatprep.mubr.bf16.mxu0 %v121
  %287 = vmatmul.mubr.bf16.gmra.mxu0 %v120
  %v288 = vpop.f32.mrf.mxu0
  %v289 = vadd.f32 %v68, %v288
  %v290 = vpop.f32.mrf.mxu0
  %v291 = vpop.f32.mrf.mxu0
  %v292 = vadd.f32 %v68, %v291
  %v293 = vpop.f32.mrf.mxu0
  %294 = vmatprep.mubr.bf16.mxu0 %v123
  %295 = vmatmul.mubr.bf16.gmra.mxu0 %v122
  %v296 = vpop.f32.mrf.mxu0
  %v297 = vadd.f32 %v68, %v296
  %v298 = vpop.f32.mrf.mxu0
  %v299 = vpop.f32.mrf.mxu0
  %v300 = vadd.f32 %v68, %v299
  %v301 = vpop.f32.mrf.mxu0
  %302 = vmatprep.mubr.bf16.mxu0 %v125
  %303 = vmatmul.mubr.bf16.gmra.mxu0 %v124
  %v304 = vpop.f32.mrf.mxu0
  %v305 = vadd.f32 %v68, %v304
  %v306 = vpop.f32.mrf.mxu0
  %v307 = vpop.f32.mrf.mxu0
  %v308 = vadd.f32 %v68, %v307
  %v309 = vpop.f32.mrf.mxu0
  %310 = vmatprep.mubr.bf16.mxu0 %v127
  %311 = vmatmul.mubr.bf16.gmra.mxu0 %v126
  %v312 = vpop.f32.mrf.mxu0
  %v313 = vadd.f32 %v68, %v312
  %v314 = vpop.f32.mrf.mxu0
  %v315 = vpop.f32.mrf.mxu0
  %v316 = vadd.f32 %v68, %v315
  %v317 = vpop.f32.mrf.mxu0
  %318 = vmatprep.mubr.bf16.mxu0 %v129
  %319 = vmatmul.mubr.bf16.gmra.mxu0 %v128
  %v320 = vpop.f32.mrf.mxu0
  %v321 = vadd.f32 %v68, %v320
  %v322 = vpop.f32.mrf.mxu0
  %v323 = vpop.f32.mrf.mxu0
  %v324 = vadd.f32 %v68, %v323
  %v325 = vpop.f32.mrf.mxu0
  %326 = vmatprep.mubr.bf16.mxu0 %v131
  %327 = vmatmul.mubr.bf16.gmra.mxu0 %v130
  %v328 = vpop.f32.mrf.mxu0
  %v329 = vadd.f32 %v68, %v328
  %v330 = vpop.f32.mrf.mxu0
  %v331 = vpop.f32.mrf.mxu0
  %v332 = vadd.f32 %v68, %v331
  %v333 = vpop.f32.mrf.mxu0
  %334 = vmatprep.mubr.bf16.mxu0 %v133
  %335 = vmatmul.mubr.bf16.gmra.mxu0 %v132
  %v336 = vpop.f32.mrf.mxu0
  %v337 = vadd.f32 %v68, %v336
  %v338 = vpop.f32.mrf.mxu0
  %v339 = vpop.f32.mrf.mxu0
  %v340 = vadd.f32 %v68, %v339
  %v341 = vpop.f32.mrf.mxu0
  %342 = vdwg.mxu0
  %v343 = vmax.f32 %v281, 0.0
  %v344 = vmax.f32 %v284, 0.0
  %v345 = vmax.f32 %v289, 0.0
  %v346 = vmax.f32 %v292, 0.0
  %v347 = vmax.f32 %v297, 0.0
  %v348 = vmax.f32 %v300, 0.0
  %v349 = vmax.f32 %v305, 0.0
  %v350 = vmax.f32 %v308, 0.0
  %v351 = vmax.f32 %v313, 0.0
  %v352 = vmax.f32 %v316, 0.0
  %v353 = vmax.f32 %v321, 0.0
  %v354 = vmax.f32 %v324, 0.0
  %v355 = vmax.f32 %v329, 0.0
  %v356 = vmax.f32 %v332, 0.0
  %v357 = vmax.f32 %v337, 0.0
  %v358 = vmax.f32 %v340, 0.0
  %v359 = vpack.c.bf16 %v344, %v343
  %v360 = vpack.c.bf16 %v346, %v345
  %v361 = vpack.c.bf16 %v348, %v347
  %v362 = vpack.c.bf16 %v350, %v349
  %v363 = vpack.c.bf16 %v352, %v351
  %v364 = vpack.c.bf16 %v354, %v353
  %v365 = vpack.c.bf16 %v356, %v355
  %v366 = vpack.c.bf16 %v358, %v357
  %v375 = vunpack.c.l.b16 %v359
  %v376 = vunpack.c.h.b16 %v359
  %v377 = vunpack.c.l.b16 %v360
  %v378 = vunpack.c.h.b16 %v360
  %v379 = vunpack.c.l.b16 %v361
  %v380 = vunpack.c.h.b16 %v361
  %v381 = vunpack.c.l.b16 %v362
  %v382 = vunpack.c.h.b16 %v362
  %v383 = vunpack.c.l.b16 %v363
  %v384 = vunpack.c.h.b16 %v363
  %v385 = vunpack.c.l.b16 %v364
  %v386 = vunpack.c.h.b16 %v364
  %v387 = vunpack.c.l.b16 %v365
  %v388 = vunpack.c.h.b16 %v365
  %v389 = vunpack.c.l.b16 %v366
  %v390 = vunpack.c.h.b16 %v366
  %v391 = vpack.c.b16 %v375, %v375
  %v392 = vpack.c.b16 %v376, %v376
  %v393 = vpack.c.b16 %v377, %v377
  %v394 = vpack.c.b16 %v378, %v378
  %v395 = vpack.c.b16 %v379, %v379
  %v396 = vpack.c.b16 %v380, %v380
  %v397 = vpack.c.b16 %v381, %v381
  %v398 = vpack.c.b16 %v382, %v382
  %v399 = vpack.c.b16 %v383, %v383
  %v400 = vpack.c.b16 %v384, %v384
  %v401 = vpack.c.b16 %v385, %v385
  %v402 = vpack.c.b16 %v386, %v386
  %v403 = vpack.c.b16 %v387, %v387
  %v404 = vpack.c.b16 %v388, %v388
  %v405 = vpack.c.b16 %v389, %v389
  %v406 = vpack.c.b16 %v390, %v390
  %423 = vst [vmem:[%s3] sm:$0xf] %v391
  %424 = vst [vmem:[%s3 + $0x4] sm:$0xf] %v392
  %425 = vst [vmem:[%s3 + $0x8] sm:$0xf] %v393
  %426 = vst [vmem:[%s3 + $0xc] sm:$0xf] %v394
  %427 = vst [vmem:[%s3 + $0x10] sm:$0xf] %v395
  %428 = vst [vmem:[%s3 + $0x14] sm:$0xf] %v396
  %429 = vst [vmem:[%s3 + $0x18] sm:$0xf] %v397
  %430 = vst [vmem:[%s3 + $0x1c] sm:$0xf] %v398
  %431 = vst [vmem:[%s3 + $0x20] sm:$0xf] %v399
  %432 = vst [vmem:[%s3 + $0x24] sm:$0xf] %v400
  %433 = vst [vmem:[%s3 + $0x28] sm:$0xf] %v401
  %434 = vst [vmem:[%s3 + $0x2c] sm:$0xf] %v402
  %435 = vst [vmem:[%s3 + $0x30] sm:$0xf] %v403
  %436 = vst [vmem:[%s3 + $0x34] sm:$0xf] %v404
  %437 = vst [vmem:[%s3 + $0x38] sm:$0xf] %v405
  %438 = vst [vmem:[%s3 + $0x3c] sm:$0xf] %v406
  // Predicated region
  $region14: #{nature_cnn_forward.4} parent=0 // pred_check
    _
  $region15: #{nature_cnn_forward.4} parent=0 // pred_check_branch
    %440 = sbr.rel (0) target = $region17
  $region16: #{nature_cnn_forward.4} parent=0 // pred_region
    _
  $region17: #{nature_cnn_forward.4} parent=0 // pred_fallthru
    _
  // Predicated region
  $region18: #{nature_cnn_forward.4} parent=0 // pred_check
    _
  $region19: #{nature_cnn_forward.4} parent=0 // pred_check_branch
    %442 = sbr.rel (0) target = $region21
  $region20: #{nature_cnn_forward.4} parent=0 // pred_region
    _
  $region21: #{nature_cnn_forward.4} parent=0 // pred_fallthru
    _

// kernel: nature_cnn_forward.5
$region0: #{nature_cnn_forward.5}
  #allocation0 [shape = 'u32[]', space=smem, size = 0x4, offset = 0x4, fixed_abs, tag = 'smem constant byte address 0x4 - core index']
  #allocation1 [shape = 'u32[144,128]{1,0:T(1,128)}', space=vmem, size = 0x12000, scoped, tag = 'internal scratch']
  %s0 = inlined_call_operand.vmem [shape: bf16[18,512], index: 0, kind: input, shape index: {}]
  %s1 = inlined_call_operand.vmem [shape: bf16[512,128], index: 1, kind: input, shape index: {}]
  %s2 = inlined_call_operand.vmem [shape: f32[1,128], index: 2, kind: input, shape index: {}]
  %s3 = inlined_call_operand.vmem [shape: bf16[18,128], index: 3, kind: output, shape index: {}]
  %s4 = sld [smem:[#allocation0]]
  $region22: #{nature_cnn_forward.5} parent=0
    _
  %s6 = ssub.s32 1, %s4
  %s7 = scalar_select 0, %s6, %s4
  // Predicated region
  $region2: #{nature_cnn_forward.5} parent=0 // pred_check
    _
  $region3: #{nature_cnn_forward.5} parent=0 // pred_check_branch
    %9 = sbr.rel (0) target = $region5
  $region4: #{nature_cnn_forward.5} parent=0 // pred_region
    _
  $region5: #{nature_cnn_forward.5} parent=0 // pred_fallthru
    _
  // Predicated region
  $region6: #{nature_cnn_forward.5} parent=0 // pred_check
    _
  $region7: #{nature_cnn_forward.5} parent=0 // pred_check_branch
    %11 = sbr.rel (0) target = $region9
  $region8: #{nature_cnn_forward.5} parent=0 // pred_region
    _
  $region9: #{nature_cnn_forward.5} parent=0 // pred_fallthru
    _
  // Predicated region
  $region10: #{nature_cnn_forward.5} parent=0 // pred_check
    _
  $region11: #{nature_cnn_forward.5} parent=0 // pred_check_branch
    %13 = sbr.rel (0) target = $region13
  $region12: #{nature_cnn_forward.5} parent=0 // pred_region
    _
  $region13: #{nature_cnn_forward.5} parent=0 // pred_fallthru
    _
  %v15 = vld [vmem:[%s0] sm:$0xff]
  %v16 = vld [vmem:[%s0 + $0x8] sm:$0xff]
  %v17 = vld [vmem:[%s0 + $0x10] sm:$0xff]
  %v18 = vld [vmem:[%s0 + $0x18] sm:$0xff]
  %v19 = vld [vmem:[%s0 + $0x20] sm:$0x11]
  %v20 = vld [vmem:[%s0 + $0x28] sm:$0x11]
  %v21 = vld [vmem:[%s1] sm:$0xf]
  %v22 = vld [vmem:[%s1 + $0x4] sm:$0xf]
  %v23 = vld [vmem:[%s1 + $0x8] sm:$0xf]
  %v24 = vld [vmem:[%s1 + $0xc] sm:$0xf]
  %v25 = vld [vmem:[%s1 + $0x10] sm:$0xf]
  %v26 = vld [vmem:[%s1 + $0x14] sm:$0xf]
  %v27 = vld [vmem:[%s1 + $0x18] sm:$0xf]
  %v28 = vld [vmem:[%s1 + $0x1c] sm:$0xf]
  %v29 = vld [vmem:[%s1 + $0x20] sm:$0xf]
  %v30 = vld [vmem:[%s1 + $0x24] sm:$0xf]
  %v31 = vld [vmem:[%s1 + $0x28] sm:$0xf]
  %v32 = vld [vmem:[%s1 + $0x2c] sm:$0xf]
  %v33 = vld [vmem:[%s1 + $0x30] sm:$0xf]
  %v34 = vld [vmem:[%s1 + $0x34] sm:$0xf]
  %v35 = vld [vmem:[%s1 + $0x38] sm:$0xf]
  %v36 = vld [vmem:[%s1 + $0x3c] sm:$0xf]
  %v37 = vld [vmem:[%s1 + $0x40] sm:$0xf]
  %v38 = vld [vmem:[%s1 + $0x44] sm:$0xf]
  %v39 = vld [vmem:[%s1 + $0x48] sm:$0xf]
  %v40 = vld [vmem:[%s1 + $0x4c] sm:$0xf]
  %v41 = vld [vmem:[%s1 + $0x50] sm:$0xf]
  %v42 = vld [vmem:[%s1 + $0x54] sm:$0xf]
  %v43 = vld [vmem:[%s1 + $0x58] sm:$0xf]
  %v44 = vld [vmem:[%s1 + $0x5c] sm:$0xf]
  %v45 = vld [vmem:[%s1 + $0x60] sm:$0xf]
  %v46 = vld [vmem:[%s1 + $0x64] sm:$0xf]
  %v47 = vld [vmem:[%s1 + $0x68] sm:$0xf]
  %v48 = vld [vmem:[%s1 + $0x6c] sm:$0xf]
  %v49 = vld [vmem:[%s1 + $0x70] sm:$0xf]
  %v50 = vld [vmem:[%s1 + $0x74] sm:$0xf]
  %v51 = vld [vmem:[%s1 + $0x78] sm:$0xf]
  %v52 = vld [vmem:[%s1 + $0x7c] sm:$0xf]
  %v53 = vld [vmem:[%s1 + $0x80] sm:$0xf]
  %v54 = vld [vmem:[%s1 + $0x84] sm:$0xf]
  %v55 = vld [vmem:[%s1 + $0x88] sm:$0xf]
  %v56 = vld [vmem:[%s1 + $0x8c] sm:$0xf]
  %v57 = vld [vmem:[%s1 + $0x90] sm:$0xf]
  %v58 = vld [vmem:[%s1 + $0x94] sm:$0xf]
  %v59 = vld [vmem:[%s1 + $0x98] sm:$0xf]
  %v60 = vld [vmem:[%s1 + $0x9c] sm:$0xf]
  %v61 = vld [vmem:[%s1 + $0xa0] sm:$0xf]
  %v62 = vld [vmem:[%s1 + $0xa4] sm:$0xf]
  %v63 = vld [vmem:[%s1 + $0xa8] sm:$0xf]
  %v64 = vld [vmem:[%s1 + $0xac] sm:$0xf]
  %v65 = vld [vmem:[%s1 + $0xb0] sm:$0xf]
  %v66 = vld [vmem:[%s1 + $0xb4] sm:$0xf]
  %v67 = vld [vmem:[%s1 + $0xb8] sm:$0xf]
  %v68 = vld [vmem:[%s1 + $0xbc] sm:$0xf]
  %v69 = vld [vmem:[%s1 + $0xc0] sm:$0xf]
  %v70 = vld [vmem:[%s1 + $0xc4] sm:$0xf]
  %v71 = vld [vmem:[%s1 + $0xc8] sm:$0xf]
  %v72 = vld [vmem:[%s1 + $0xcc] sm:$0xf]
  %v73 = vld [vmem:[%s1 + $0xd0] sm:$0xf]
  %v74 = vld [vmem:[%s1 + $0xd4] sm:$0xf]
  %v75 = vld [vmem:[%s1 + $0xd8] sm:$0xf]
  %v76 = vld [vmem:[%s1 + $0xdc] sm:$0xf]
  %v77 = vld [vmem:[%s1 + $0xe0] sm:$0xf]
  %v78 = vld [vmem:[%s1 + $0xe4] sm:$0xf]
  %v79 = vld [vmem:[%s1 + $0xe8] sm:$0xf]
  %v80 = vld [vmem:[%s1 + $0xec] sm:$0xf]
  %v81 = vld [vmem:[%s1 + $0xf0] sm:$0xf]
  %v82 = vld [vmem:[%s1 + $0xf4] sm:$0xf]
  %v83 = vld [vmem:[%s1 + $0xf8] sm:$0xf]
  %v84 = vld [vmem:[%s1 + $0xfc] sm:$0xf]
  %v85 = vld [vmem:[%s2] sm:$0x1]
  %v87 = vlaneseq
  %v88 = vshrl.u32 %v87, 7
  %v89 = vsub.s32 0, %v88
  %v90 = vrot.slane %v85, %v89
  %v98 = vunpack.c.l.b16 %v15
  %v99 = vunpack.c.h.b16 %v15
  %v100 = vunpack.c.l.b16 %v16
  %v101 = vunpack.c.h.b16 %v16
  %v102 = vunpack.c.l.b16 %v17
  %v103 = vunpack.c.h.b16 %v17
  %v104 = vunpack.c.l.b16 %v18
  %v105 = vunpack.c.h.b16 %v18
  %v106 = vunpack.c.l.b16 %v19
  %v107 = vunpack.c.h.b16 %v19
  %v108 = vunpack.c.l.b16 %v20
  %v109 = vunpack.c.h.b16 %v20
  %v110 = vpack.c.b16 %v102, %v98
  %v111 = vpack.c.b16 %v103, %v99
  %v112 = vpack.c.b16 %v104, %v100
  %v113 = vpack.c.b16 %v105, %v101
  %v114 = vpack.c.b16 %v106, %v106
  %v115 = vpack.c.b16 %v107, %v107
  %v116 = vpack.c.b16 %v108, %v108
  %v117 = vpack.c.b16 %v109, %v109
  %v190 = vunpack.c.l.b16 %v21
  %v191 = vunpack.c.l.b16 %v22
  %v192 = vunpack.c.l.b16 %v23
  %v193 = vunpack.c.l.b16 %v24
  %v194 = vunpack.c.l.b16 %v25
  %v195 = vunpack.c.l.b16 %v26
  %v196 = vunpack.c.l.b16 %v27
  %v197 = vunpack.c.l.b16 %v28
  %v198 = vunpack.c.l.b16 %v29
  %v199 = vunpack.c.l.b16 %v30
  %v200 = vunpack.c.l.b16 %v31
  %v201 = vunpack.c.l.b16 %v32
  %v202 = vunpack.c.l.b16 %v33
  %v203 = vunpack.c.l.b16 %v34
  %v204 = vunpack.c.l.b16 %v35
  %v205 = vunpack.c.l.b16 %v36
  %v206 = vunpack.c.l.b16 %v37
  %v207 = vunpack.c.l.b16 %v38
  %v208 = vunpack.c.l.b16 %v39
  %v209 = vunpack.c.l.b16 %v40
  %v210 = vunpack.c.l.b16 %v41
  %v211 = vunpack.c.l.b16 %v42
  %v212 = vunpack.c.l.b16 %v43
  %v213 = vunpack.c.l.b16 %v44
  %v214 = vunpack.c.l.b16 %v45
  %v215 = vunpack.c.l.b16 %v46
  %v216 = vunpack.c.l.b16 %v47
  %v217 = vunpack.c.l.b16 %v48
  %v218 = vunpack.c.l.b16 %v49
  %v219 = vunpack.c.l.b16 %v50
  %v220 = vunpack.c.l.b16 %v51
  %v221 = vunpack.c.l.b16 %v52
  %v222 = vunpack.c.l.b16 %v53
  %v223 = vunpack.c.l.b16 %v54
  %v224 = vunpack.c.l.b16 %v55
  %v225 = vunpack.c.l.b16 %v56
  %v226 = vunpack.c.l.b16 %v57
  %v227 = vunpack.c.l.b16 %v58
  %v228 = vunpack.c.l.b16 %v59
  %v229 = vunpack.c.l.b16 %v60
  %v230 = vunpack.c.l.b16 %v61
  %v231 = vunpack.c.l.b16 %v62
  %v232 = vunpack.c.l.b16 %v63
  %v233 = vunpack.c.l.b16 %v64
  %v234 = vunpack.c.l.b16 %v65
  %v235 = vunpack.c.l.b16 %v66
  %v236 = vunpack.c.l.b16 %v67
  %v237 = vunpack.c.l.b16 %v68
  %v238 = vunpack.c.l.b16 %v69
  %v239 = vunpack.c.l.b16 %v70
  %v240 = vunpack.c.l.b16 %v71
  %v241 = vunpack.c.l.b16 %v72
  %v242 = vunpack.c.l.b16 %v73
  %v243 = vunpack.c.l.b16 %v74
  %v244 = vunpack.c.l.b16 %v75
  %v245 = vunpack.c.l.b16 %v76
  %v246 = vunpack.c.l.b16 %v77
  %v247 = vunpack.c.l.b16 %v78
  %v248 = vunpack.c.l.b16 %v79
  %v249 = vunpack.c.l.b16 %v80
  %v250 = vunpack.c.l.b16 %v81
  %v251 = vunpack.c.l.b16 %v82
  %v252 = vunpack.c.l.b16 %v83
  %v253 = vunpack.c.l.b16 %v84
  %v254 = vpack.c.b16 %v191, %v190
  %v255 = vpack.c.b16 %v193, %v192
  %v256 = vpack.c.b16 %v195, %v194
  %v257 = vpack.c.b16 %v197, %v196
  %v258 = vpack.c.b16 %v199, %v198
  %v259 = vpack.c.b16 %v201, %v200
  %v260 = vpack.c.b16 %v203, %v202
  %v261 = vpack.c.b16 %v205, %v204
  %v262 = vpack.c.b16 %v207, %v206
  %v263 = vpack.c.b16 %v209, %v208
  %v264 = vpack.c.b16 %v211, %v210
  %v265 = vpack.c.b16 %v213, %v212
  %v266 = vpack.c.b16 %v215, %v214
  %v267 = vpack.c.b16 %v217, %v216
  %v268 = vpack.c.b16 %v219, %v218
  %v269 = vpack.c.b16 %v221, %v220
  %v270 = vpack.c.b16 %v223, %v222
  %v271 = vpack.c.b16 %v225, %v224
  %v272 = vpack.c.b16 %v227, %v226
  %v273 = vpack.c.b16 %v229, %v228
  %v274 = vpack.c.b16 %v231, %v230
  %v275 = vpack.c.b16 %v233, %v232
  %v276 = vpack.c.b16 %v235, %v234
  %v277 = vpack.c.b16 %v237, %v236
  %v278 = vpack.c.b16 %v239, %v238
  %v279 = vpack.c.b16 %v241, %v240
  %v280 = vpack.c.b16 %v243, %v242
  %v281 = vpack.c.b16 %v245, %v244
  %v282 = vpack.c.b16 %v247, %v246
  %v283 = vpack.c.b16 %v249, %v248
  %v284 = vpack.c.b16 %v251, %v250
  %v285 = vpack.c.b16 %v253, %v252
  %318 = vmatprep.subr.bf16.mxu0 0
  %319 = vmatpush1.bf16.msra.mxu0 %v261
  %320 = vmatprep.subr.bf16.mxu0 0
  %321 = vmatpush1.bf16.msra.mxu0 %v260
  %322 = vmatprep.subr.bf16.mxu0 0
  %323 = vmatpush1.bf16.msra.mxu0 %v259
  %324 = vmatprep.subr.bf16.mxu0 0
  %325 = vmatpush1.bf16.msra.mxu0 %v258
  %326 = vmatprep.subr.bf16.mxu0 0
  %327 = vmatpush1.bf16.msra.mxu0 %v257
  %328 = vmatprep.subr.bf16.mxu0 0
  %329 = vmatpush1.bf16.msra.mxu0 %v256
  %330 = vmatprep.subr.bf16.mxu0 0
  %331 = vmatpush1.bf16.msra.mxu0 %v255
  %332 = vmatprep.subr.bf16.mxu0 0
  %333 = vmatpush1.bf16.msra.mxu0 %v254
  %334 = vmatprep.subr.bf16.mxu0 0
  %335 = vmatpush2.bf16.msra.mxu0 %v269
  %336 = vmatprep.subr.bf16.mxu0 0
  %337 = vmatpush2.bf16.msra.mxu0 %v268
  %338 = vmatprep.subr.bf16.mxu0 0
  %339 = vmatpush2.bf16.msra.mxu0 %v267
  %340 = vmatprep.subr.bf16.mxu0 0
  %341 = vmatpush2.bf16.msra.mxu0 %v266
  %342 = vmatprep.subr.bf16.mxu0 0
  %343 = vmatpush2.bf16.msra.mxu0 %v265
  %344 = vmatprep.subr.bf16.mxu0 0
  %345 = vmatpush2.bf16.msra.mxu0 %v264
  %346 = vmatprep.subr.bf16.mxu0 0
  %347 = vmatpush2.bf16.msra.mxu0 %v263
  %348 = vmatprep.subr.bf16.mxu0 0
  %349 = vmatpush2.bf16.msra.mxu0 %v262
  %350 = vmatprep.mubr.bf16.mxu0 %v111
  %351 = vmatmul.mubr.bf16.gmra.mxu0 %v110
  %v352 = vpop.f32.mrf.mxu0
  %v353 = vadd.f32 %v90, %v352
  %v354 = vpop.f32.mrf.mxu0
  %v355 = vpop.f32.mrf.mxu0
  %v356 = vadd.f32 %v90, %v355
  %v357 = vpop.f32.mrf.mxu0
  %358 = vmatprep.mubr.bf16.mxu0 %v115
  %359 = vmatmul.mubr.bf16.gmra.mxu0 %v114
  %v360 = vpop.f32.mrf.mxu0
  %v361 = vadd.f32 %v90, %v360
  %v362 = vpop.f32.mrf.mxu0
  %v363 = vpop.f32.mrf.mxu0
  %v364 = vpop.f32.mrf.mxu0
  %365 = vdwg.mxu0
  %366 = vmatprep.subr.bf16.mxu0 0
  %367 = vmatpush1.bf16.msra.mxu0 %v277
  %368 = vmatprep.subr.bf16.mxu0 0
  %369 = vmatpush1.bf16.msra.mxu0 %v276
  %370 = vmatprep.subr.bf16.mxu0 0
  %371 = vmatpush1.bf16.msra.mxu0 %v275
  %372 = vmatprep.subr.bf16.mxu0 0
  %373 = vmatpush1.bf16.msra.mxu0 %v274
  %374 = vmatprep.subr.bf16.mxu0 0
  %375 = vmatpush1.bf16.msra.mxu0 %v273
  %376 = vmatprep.subr.bf16.mxu0 0
  %377 = vmatpush1.bf16.msra.mxu0 %v272
  %378 = vmatprep.subr.bf16.mxu0 0
  %379 = vmatpush1.bf16.msra.mxu0 %v271
  %380 = vmatprep.subr.bf16.mxu0 0
  %381 = vmatpush1.bf16.msra.mxu0 %v270
  %382 = vmatprep.subr.bf16.mxu0 0
  %383 = vmatpush2.bf16.msra.mxu0 %v285
  %384 = vmatprep.subr.bf16.mxu0 0
  %385 = vmatpush2.bf16.msra.mxu0 %v284
  %386 = vmatprep.subr.bf16.mxu0 0
  %387 = vmatpush2.bf16.msra.mxu0 %v283
  %388 = vmatprep.subr.bf16.mxu0 0
  %389 = vmatpush2.bf16.msra.mxu0 %v282
  %390 = vmatprep.subr.bf16.mxu0 0
  %391 = vmatpush2.bf16.msra.mxu0 %v281
  %392 = vmatprep.subr.bf16.mxu0 0
  %393 = vmatpush2.bf16.msra.mxu0 %v280
  %394 = vmatprep.subr.bf16.mxu0 0
  %395 = vmatpush2.bf16.msra.mxu0 %v279
  %396 = vmatprep.subr.bf16.mxu0 0
  %397 = vmatpush2.bf16.msra.mxu0 %v278
  %398 = vmatprep.mubr.bf16.mxu0 %v113
  %399 = vmatmul.mubr.bf16.gmra.mxu0 %v112
  %v400 = vpop.f32.mrf.mxu0
  %v401 = vadd.f32 %v353, %v400
  %v402 = vpop.f32.mrf.mxu0
  %v403 = vpop.f32.mrf.mxu0
  %v404 = vadd.f32 %v356, %v403
  %v405 = vpop.f32.mrf.mxu0
  %406 = vmatprep.mubr.bf16.mxu0 %v117
  %407 = vmatmul.mubr.bf16.gmra.mxu0 %v116
  %v408 = vpop.f32.mrf.mxu0
  %v409 = vadd.f32 %v361, %v408
  %v410 = vpop.f32.mrf.mxu0
  %v411 = vpop.f32.mrf.mxu0
  %v412 = vpop.f32.mrf.mxu0
  %413 = vdwg.mxu0
  %v414 = vmax.f32 %v401, 0.0
  %v415 = vmax.f32 %v404, 0.0
  %v416 = vmax.f32 %v409, 0.0
  %v417 = vpack.c.bf16 %v415, %v414
  %v418 = vpack.c.bf16 %v416, %v416
  %v421 = vunpack.c.l.b16 %v417
  %v422 = vunpack.c.h.b16 %v417
  %v423 = vunpack.c.l.b16 %v418
  %v424 = vpack.c.b16 %v421, %v421
  %v425 = vpack.c.b16 %v422, %v422
  %v426 = vpack.c.b16 %v423, %v423
  %430 = vst [vmem:[%s3] sm:$0xf] %v424
  %431 = vst [vmem:[%s3 + $0x4] sm:$0xf] %v425
  %432 = vst [vmem:[%s3 + $0x8] sm:$0x1] %v426
  // Predicated region
  $region14: #{nature_cnn_forward.5} parent=0 // pred_check
    _
  $region15: #{nature_cnn_forward.5} parent=0 // pred_check_branch
    %434 = sbr.rel (0) target = $region17
  $region16: #{nature_cnn_forward.5} parent=0 // pred_region
    _
  $region17: #{nature_cnn_forward.5} parent=0 // pred_fallthru
    _
  // Predicated region
  $region18: #{nature_cnn_forward.5} parent=0 // pred_check
    _
  $region19: #{nature_cnn_forward.5} parent=0 // pred_check_branch
    %436 = sbr.rel (0) target = $region21
  $region20: #{nature_cnn_forward.5} parent=0 // pred_region
    _
  $region21: #{nature_cnn_forward.5} parent=0 // pred_fallthru
    _

// kernel: nature_cnn_forward.6
$region0: #{nature_cnn_forward.6}
  #allocation0 [shape = 'u32[]', space=smem, size = 0x4, offset = 0x4, fixed_abs, tag = 'smem constant byte address 0x4 - core index']
  #allocation1 [shape = 'u32[144,128]{1,0:T(1,128)}', space=vmem, size = 0x12000, scoped, tag = 'internal scratch']
  %s0 = inlined_call_operand.vmem [shape: bf16[2,576], index: 0, kind: input, shape index: {}]
  %s1 = inlined_call_operand.vmem [shape: bf16[576,128], index: 1, kind: input, shape index: {}]
  %s2 = inlined_call_operand.vmem [shape: f32[1,128], index: 2, kind: input, shape index: {}]
  %s3 = inlined_call_operand.vmem [shape: bf16[2,128], index: 3, kind: output, shape index: {}]
  %s4 = sld [smem:[#allocation0]]
  $region22: #{nature_cnn_forward.6} parent=0
    _
  %s6 = ssub.s32 1, %s4
  %s7 = scalar_select 0, %s6, %s4
  // Predicated region
  $region2: #{nature_cnn_forward.6} parent=0 // pred_check
    _
  $region3: #{nature_cnn_forward.6} parent=0 // pred_check_branch
    %9 = sbr.rel (0) target = $region5
  $region4: #{nature_cnn_forward.6} parent=0 // pred_region
    _
  $region5: #{nature_cnn_forward.6} parent=0 // pred_fallthru
    _
  // Predicated region
  $region6: #{nature_cnn_forward.6} parent=0 // pred_check
    _
  $region7: #{nature_cnn_forward.6} parent=0 // pred_check_branch
    %11 = sbr.rel (0) target = $region9
  $region8: #{nature_cnn_forward.6} parent=0 // pred_region
    _
  $region9: #{nature_cnn_forward.6} parent=0 // pred_fallthru
    _
  // Predicated region
  $region10: #{nature_cnn_forward.6} parent=0 // pred_check
    _
  $region11: #{nature_cnn_forward.6} parent=0 // pred_check_branch
    %13 = sbr.rel (0) target = $region13
  $region12: #{nature_cnn_forward.6} parent=0 // pred_region
    _
  $region13: #{nature_cnn_forward.6} parent=0 // pred_fallthru
    _
  %v15 = vld [vmem:[%s0] sm:$0x1f]
  %v16 = vld [vmem:[%s1] sm:$0xf]
  %v17 = vld [vmem:[%s1 + $0x4] sm:$0xf]
  %v18 = vld [vmem:[%s1 + $0x8] sm:$0xf]
  %v19 = vld [vmem:[%s1 + $0xc] sm:$0xf]
  %v20 = vld [vmem:[%s1 + $0x10] sm:$0xf]
  %v21 = vld [vmem:[%s1 + $0x14] sm:$0xf]
  %v22 = vld [vmem:[%s1 + $0x18] sm:$0xf]
  %v23 = vld [vmem:[%s1 + $0x1c] sm:$0xf]
  %v24 = vld [vmem:[%s1 + $0x20] sm:$0xf]
  %v25 = vld [vmem:[%s1 + $0x24] sm:$0xf]
  %v26 = vld [vmem:[%s1 + $0x28] sm:$0xf]
  %v27 = vld [vmem:[%s1 + $0x2c] sm:$0xf]
  %v28 = vld [vmem:[%s1 + $0x30] sm:$0xf]
  %v29 = vld [vmem:[%s1 + $0x34] sm:$0xf]
  %v30 = vld [vmem:[%s1 + $0x38] sm:$0xf]
  %v31 = vld [vmem:[%s1 + $0x3c] sm:$0xf]
  %v32 = vld [vmem:[%s1 + $0x40] sm:$0xf]
  %v33 = vld [vmem:[%s1 + $0x44] sm:$0xf]
  %v34 = vld [vmem:[%s1 + $0x48] sm:$0xf]
  %v35 = vld [vmem:[%s1 + $0x4c] sm:$0xf]
  %v36 = vld [vmem:[%s1 + $0x50] sm:$0xf]
  %v37 = vld [vmem:[%s1 + $0x54] sm:$0xf]
  %v38 = vld [vmem:[%s1 + $0x58] sm:$0xf]
  %v39 = vld [vmem:[%s1 + $0x5c] sm:$0xf]
  %v40 = vld [vmem:[%s1 + $0x60] sm:$0xf]
  %v41 = vld [vmem:[%s1 + $0x64] sm:$0xf]
  %v42 = vld [vmem:[%s1 + $0x68] sm:$0xf]
  %v43 = vld [vmem:[%s1 + $0x6c] sm:$0xf]
  %v44 = vld [vmem:[%s1 + $0x70] sm:$0xf]
  %v45 = vld [vmem:[%s1 + $0x74] sm:$0xf]
  %v46 = vld [vmem:[%s1 + $0x78] sm:$0xf]
  %v47 = vld [vmem:[%s1 + $0x7c] sm:$0xf]
  %v48 = vld [vmem:[%s1 + $0x80] sm:$0xf]
  %v49 = vld [vmem:[%s1 + $0x84] sm:$0xf]
  %v50 = vld [vmem:[%s1 + $0x88] sm:$0xf]
  %v51 = vld [vmem:[%s1 + $0x8c] sm:$0xf]
  %v52 = vld [vmem:[%s1 + $0x90] sm:$0xf]
  %v53 = vld [vmem:[%s1 + $0x94] sm:$0xf]
  %v54 = vld [vmem:[%s1 + $0x98] sm:$0xf]
  %v55 = vld [vmem:[%s1 + $0x9c] sm:$0xf]
  %v56 = vld [vmem:[%s1 + $0xa0] sm:$0xf]
  %v57 = vld [vmem:[%s1 + $0xa4] sm:$0xf]
  %v58 = vld [vmem:[%s1 + $0xa8] sm:$0xf]
  %v59 = vld [vmem:[%s1 + $0xac] sm:$0xf]
  %v60 = vld [vmem:[%s1 + $0xb0] sm:$0xf]
  %v61 = vld [vmem:[%s1 + $0xb4] sm:$0xf]
  %v62 = vld [vmem:[%s1 + $0xb8] sm:$0xf]
  %v63 = vld [vmem:[%s1 + $0xbc] sm:$0xf]
  %v64 = vld [vmem:[%s1 + $0xc0] sm:$0xf]
  %v65 = vld [vmem:[%s1 + $0xc4] sm:$0xf]
  %v66 = vld [vmem:[%s1 + $0xc8] sm:$0xf]
  %v67 = vld [vmem:[%s1 + $0xcc] sm:$0xf]
  %v68 = vld [vmem:[%s1 + $0xd0] sm:$0xf]
  %v69 = vld [vmem:[%s1 + $0xd4] sm:$0xf]
  %v70 = vld [vmem:[%s1 + $0xd8] sm:$0xf]
  %v71 = vld [vmem:[%s1 + $0xdc] sm:$0xf]
  %v72 = vld [vmem:[%s1 + $0xe0] sm:$0xf]
  %v73 = vld [vmem:[%s1 + $0xe4] sm:$0xf]
  %v74 = vld [vmem:[%s1 + $0xe8] sm:$0xf]
  %v75 = vld [vmem:[%s1 + $0xec] sm:$0xf]
  %v76 = vld [vmem:[%s1 + $0xf0] sm:$0xf]
  %v77 = vld [vmem:[%s1 + $0xf4] sm:$0xf]
  %v78 = vld [vmem:[%s1 + $0xf8] sm:$0xf]
  %v79 = vld [vmem:[%s1 + $0xfc] sm:$0xf]
  %v80 = vld [vmem:[%s1 + $0x100] sm:$0xf]
  %v81 = vld [vmem:[%s1 + $0x104] sm:$0xf]
  %v82 = vld [vmem:[%s1 + $0x108] sm:$0xf]
  %v83 = vld [vmem:[%s1 + $0x10c] sm:$0xf]
  %v84 = vld [vmem:[%s1 + $0x110] sm:$0xf]
  %v85 = vld [vmem:[%s1 + $0x114] sm:$0xf]
  %v86 = vld [vmem:[%s1 + $0x118] sm:$0xf]
  %v87 = vld [vmem:[%s1 + $0x11c] sm:$0xf]
  %v88 = vld [vmem:[%s2] sm:$0x1]
  %v90 = vlaneseq
  %v91 = vshrl.u32 %v90, 7
  %v92 = vsub.s32 0, %v91
  %v93 = vrot.slane %v88, %v92
  %v96 = vcombine.high %v15, %v15
  %v98 = vunpack.c.l.s4 1966171168
  %v99 = vunpack.c.0.s8 %v98
  %v100 = vlaneseq
  %v101 = vshrl.u32 %v100, 7
  %v102 = vsub.s32 %v99, %v101
  %v103 = vrot.slane %v15, %v102
  %v105 = vunpack.c.l.s4 1966171168
  %v106 = vunpack.c.0.s8 %v105
  %v107 = vlaneseq
  %v108 = vshrl.u32 %v107, 7
  %v109 = vsub.s32 %v106, %v108
  %v110 = vrot.slane %v96, %v109
  %v111 = vcombine.high %v103, %v103
  %v113 = vunpack.c.l.s4 1966171168
  %v114 = vunpack.c.0.s8 %v113
  %v115 = vlaneseq
  %v116 = vshrl.u32 %v115, 7
  %v117 = vsub.s32 %v114, %v116
  %v118 = vrot.slane %v103, %v117
  %v120 = vunpack.c.l.s4 1966171168
  %v121 = vunpack.c.0.s8 %v120
  %v122 = vlaneseq
  %v123 = vshrl.u32 %v122, 7
  %v124 = vsub.s32 %v121, %v123
  %v125 = vrot.slane %v110, %v124
  %v127 = vunpack.c.l.s4 1966171168
  %v128 = vunpack.c.0.s8 %v127
  %v129 = vlaneseq
  %v130 = vshrl.u32 %v129, 7
  %v131 = vsub.s32 %v128, %v130
  %v132 = vrot.slane %v111, %v131
  %v133 = vcombine.high %v118, %v118
  %v134 = vcombine.high %v132, %v132
  %v211 = vunpack.c.l.b16 %v16
  %v212 = vunpack.c.l.b16 %v17
  %v213 = vunpack.c.l.b16 %v18
  %v214 = vunpack.c.l.b16 %v19
  %v215 = vunpack.c.l.b16 %v20
  %v216 = vunpack.c.l.b16 %v21
  %v217 = vunpack.c.l.b16 %v22
  %v218 = vunpack.c.l.b16 %v23
  %v219 = vunpack.c.l.b16 %v24
  %v220 = vunpack.c.l.b16 %v25
  %v221 = vunpack.c.l.b16 %v26
  %v222 = vunpack.c.l.b16 %v27
  %v223 = vunpack.c.l.b16 %v28
  %v224 = vunpack.c.l.b16 %v29
  %v225 = vunpack.c.l.b16 %v30
  %v226 = vunpack.c.l.b16 %v31
  %v227 = vunpack.c.l.b16 %v32
  %v228 = vunpack.c.l.b16 %v33
  %v229 = vunpack.c.l.b16 %v34
  %v230 = vunpack.c.l.b16 %v35
  %v231 = vunpack.c.l.b16 %v36
  %v232 = vunpack.c.l.b16 %v37
  %v233 = vunpack.c.l.b16 %v38
  %v234 = vunpack.c.l.b16 %v39
  %v235 = vunpack.c.l.b16 %v40
  %v236 = vunpack.c.l.b16 %v41
  %v237 = vunpack.c.l.b16 %v42
  %v238 = vunpack.c.l.b16 %v43
  %v239 = vunpack.c.l.b16 %v44
  %v240 = vunpack.c.l.b16 %v45
  %v241 = vunpack.c.l.b16 %v46
  %v242 = vunpack.c.l.b16 %v47
  %v243 = vunpack.c.l.b16 %v48
  %v244 = vunpack.c.l.b16 %v49
  %v245 = vunpack.c.l.b16 %v50
  %v246 = vunpack.c.l.b16 %v51
  %v247 = vunpack.c.l.b16 %v52
  %v248 = vunpack.c.l.b16 %v53
  %v249 = vunpack.c.l.b16 %v54
  %v250 = vunpack.c.l.b16 %v55
  %v251 = vunpack.c.l.b16 %v56
  %v252 = vunpack.c.l.b16 %v57
  %v253 = vunpack.c.l.b16 %v58
  %v254 = vunpack.c.l.b16 %v59
  %v255 = vunpack.c.l.b16 %v60
  %v256 = vunpack.c.l.b16 %v61
  %v257 = vunpack.c.l.b16 %v62
  %v258 = vunpack.c.l.b16 %v63
  %v259 = vunpack.c.l.b16 %v64
  %v260 = vunpack.c.l.b16 %v65
  %v261 = vunpack.c.l.b16 %v66
  %v262 = vunpack.c.l.b16 %v67
  %v263 = vunpack.c.l.b16 %v68
  %v264 = vunpack.c.l.b16 %v69
  %v265 = vunpack.c.l.b16 %v70
  %v266 = vunpack.c.l.b16 %v71
  %v267 = vunpack.c.l.b16 %v72
  %v268 = vunpack.c.l.b16 %v73
  %v269 = vunpack.c.l.b16 %v74
  %v270 = vunpack.c.l.b16 %v75
  %v271 = vunpack.c.l.b16 %v76
  %v272 = vunpack.c.l.b16 %v77
  %v273 = vunpack.c.l.b16 %v78
  %v274 = vunpack.c.l.b16 %v79
  %v275 = vunpack.c.l.b16 %v80
  %v276 = vunpack.c.l.b16 %v81
  %v277 = vunpack.c.l.b16 %v82
  %v278 = vunpack.c.l.b16 %v83
  %v279 = vunpack.c.l.b16 %v84
  %v280 = vunpack.c.l.b16 %v85
  %v281 = vunpack.c.l.b16 %v86
  %v282 = vunpack.c.l.b16 %v87
  %v283 = vpack.c.b16 %v212, %v211
  %v284 = vpack.c.b16 %v214, %v213
  %v285 = vpack.c.b16 %v216, %v215
  %v286 = vpack.c.b16 %v218, %v217
  %v287 = vpack.c.b16 %v220, %v219
  %v288 = vpack.c.b16 %v222, %v221
  %v289 = vpack.c.b16 %v224, %v223
  %v290 = vpack.c.b16 %v226, %v225
  %v291 = vpack.c.b16 %v228, %v227
  %v292 = vpack.c.b16 %v230, %v229
  %v293 = vpack.c.b16 %v232, %v231
  %v294 = vpack.c.b16 %v234, %v233
  %v295 = vpack.c.b16 %v236, %v235
  %v296 = vpack.c.b16 %v238, %v237
  %v297 = vpack.c.b16 %v240, %v239
  %v298 = vpack.c.b16 %v242, %v241
  %v299 = vpack.c.b16 %v244, %v243
  %v300 = vpack.c.b16 %v246, %v245
  %v301 = vpack.c.b16 %v248, %v247
  %v302 = vpack.c.b16 %v250, %v249
  %v303 = vpack.c.b16 %v252, %v251
  %v304 = vpack.c.b16 %v254, %v253
  %v305 = vpack.c.b16 %v256, %v255
  %v306 = vpack.c.b16 %v258, %v257
  %v307 = vpack.c.b16 %v260, %v259
  %v308 = vpack.c.b16 %v262, %v261
  %v309 = vpack.c.b16 %v264, %v263
  %v310 = vpack.c.b16 %v266, %v265
  %v311 = vpack.c.b16 %v268, %v267
  %v312 = vpack.c.b16 %v270, %v269
  %v313 = vpack.c.b16 %v272, %v271
  %v314 = vpack.c.b16 %v274, %v273
  %v315 = vpack.c.b16 %v276, %v275
  %v316 = vpack.c.b16 %v278, %v277
  %v317 = vpack.c.b16 %v280, %v279
  %v318 = vpack.c.b16 %v282, %v281
  %vm355 = vcmask 523264
  %v357 = vsel %vm355, %v125, 0
  %359 = vmatprep.subr.bf16.mxu0 0
  %360 = vmatpush1.bf16.msra.mxu0 %v290
  %361 = vmatprep.subr.bf16.mxu0 0
  %362 = vmatpush1.bf16.msra.mxu0 %v289
  %363 = vmatprep.subr.bf16.mxu0 0
  %364 = vmatpush1.bf16.msra.mxu0 %v288
  %365 = vmatprep.subr.bf16.mxu0 0
  %366 = vmatpush1.bf16.msra.mxu0 %v287
  %367 = vmatprep.subr.bf16.mxu0 0
  %368 = vmatpush1.bf16.msra.mxu0 %v286
  %369 = vmatprep.subr.bf16.mxu0 0
  %370 = vmatpush1.bf16.msra.mxu0 %v285
  %371 = vmatprep.subr.bf16.mxu0 0
  %372 = vmatpush1.bf16.msra.mxu0 %v284
  %373 = vmatprep.subr.bf16.mxu0 0
  %374 = vmatpush1.bf16.msra.mxu0 %v283
  %375 = vmatprep.subr.bf16.mxu0 0
  %376 = vmatpush2.bf16.msra.mxu0 %v298
  %377 = vmatprep.subr.bf16.mxu0 0
  %378 = vmatpush2.bf16.msra.mxu0 %v297
  %379 = vmatprep.subr.bf16.mxu0 0
  %380 = vmatpush2.bf16.msra.mxu0 %v296
  %381 = vmatprep.subr.bf16.mxu0 0
  %382 = vmatpush2.bf16.msra.mxu0 %v295
  %383 = vmatprep.subr.bf16.mxu0 0
  %384 = vmatpush2.bf16.msra.mxu0 %v294
  %385 = vmatprep.subr.bf16.mxu0 0
  %386 = vmatpush2.bf16.msra.mxu0 %v293
  %387 = vmatprep.subr.bf16.mxu0 0
  %388 = vmatpush2.bf16.msra.mxu0 %v292
  %389 = vmatprep.subr.bf16.mxu0 0
  %390 = vmatpush2.bf16.msra.mxu0 %v291
  %391 = vmatprep.mubr.bf16.mxu0 %v132
  %392 = vmatmul.mubr.bf16.gmra.mxu0 %v118
  %v393 = vpop.f32.mrf.mxu0
  %v394 = vadd.f32 %v93, %v393
  %v395 = vpop.f32.mrf.mxu0
  %v396 = vpop.f32.mrf.mxu0
  %v397 = vpop.f32.mrf.mxu0
  %398 = vdwg.mxu0
  %399 = vmatprep.subr.bf16.mxu0 0
  %400 = vmatpush1.bf16.msra.mxu0 %v306
  %401 = vmatprep.subr.bf16.mxu0 0
  %402 = vmatpush1.bf16.msra.mxu0 %v305
  %403 = vmatprep.subr.bf16.mxu0 0
  %404 = vmatpush1.bf16.msra.mxu0 %v304
  %405 = vmatprep.subr.bf16.mxu0 0
  %406 = vmatpush1.bf16.msra.mxu0 %v303
  %407 = vmatprep.subr.bf16.mxu0 0
  %408 = vmatpush1.bf16.msra.mxu0 %v302
  %409 = vmatprep.subr.bf16.mxu0 0
  %410 = vmatpush1.bf16.msra.mxu0 %v301
  %411 = vmatprep.subr.bf16.mxu0 0
  %412 = vmatpush1.bf16.msra.mxu0 %v300
  %413 = vmatprep.subr.bf16.mxu0 0
  %414 = vmatpush1.bf16.msra.mxu0 %v299
  %415 = vmatprep.subr.bf16.mxu0 0
  %416 = vmatpush2.bf16.msra.mxu0 %v314
  %417 = vmatprep.subr.bf16.mxu0 0
  %418 = vmatpush2.bf16.msra.mxu0 %v313
  %419 = vmatprep.subr.bf16.mxu0 0
  %420 = vmatpush2.bf16.msra.mxu0 %v312
  %421 = vmatprep.subr.bf16.mxu0 0
  %422 = vmatpush2.bf16.msra.mxu0 %v311
  %423 = vmatprep.subr.bf16.mxu0 0
  %424 = vmatpush2.bf16.msra.mxu0 %v310
  %425 = vmatprep.subr.bf16.mxu0 0
  %426 = vmatpush2.bf16.msra.mxu0 %v309
  %427 = vmatprep.subr.bf16.mxu0 0
  %428 = vmatpush2.bf16.msra.mxu0 %v308
  %429 = vmatprep.subr.bf16.mxu0 0
  %430 = vmatpush2.bf16.msra.mxu0 %v307
  %431 = vmatprep.mubr.bf16.mxu0 %v134
  %432 = vmatmul.mubr.bf16.gmra.mxu0 %v133
  %v433 = vpop.f32.mrf.mxu0
  %v434 = vadd.f32 %v394, %v433
  %v435 = vpop.f32.mrf.mxu0
  %v436 = vpop.f32.mrf.mxu0
  %v437 = vpop.f32.mrf.mxu0
  %438 = vdwg.mxu0
  %439 = vmatprep.subr.bf16.mxu0 0
  %440 = vmatpush1.bf16.msra.mxu0 0
  %441 = vmatprep.subr.bf16.mxu0 0
  %442 = vmatpush1.bf16.msra.mxu0 0
  %443 = vmatprep.subr.bf16.mxu0 0
  %444 = vmatpush1.bf16.msra.mxu0 0
  %445 = vmatprep.subr.bf16.mxu0 0
  %446 = vmatpush1.bf16.msra.mxu0 0
  %447 = vmatprep.subr.bf16.mxu0 0
  %448 = vmatpush1.bf16.msra.mxu0 %v318
  %449 = vmatprep.subr.bf16.mxu0 0
  %450 = vmatpush1.bf16.msra.mxu0 %v317
  %451 = vmatprep.subr.bf16.mxu0 0
  %452 = vmatpush1.bf16.msra.mxu0 %v316
  %453 = vmatprep.subr.bf16.mxu0 0
  %454 = vmatpush1.bf16.msra.mxu0 %v315
  %455 = vmatprep.subr.bf16.mxu0 0
  %456 = vmatpush2.bf16.msra.mxu0 0
  %457 = vmatprep.subr.bf16.mxu0 0
  %458 = vmatpush2.bf16.msra.mxu0 0
  %459 = vmatprep.subr.bf16.mxu0 0
  %460 = vmatpush2.bf16.msra.mxu0 0
  %461 = vmatprep.subr.bf16.mxu0 0
  %462 = vmatpush2.bf16.msra.mxu0 0
  %463 = vmatprep.subr.bf16.mxu0 0
  %464 = vmatpush2.bf16.msra.mxu0 0
  %465 = vmatprep.subr.bf16.mxu0 0
  %466 = vmatpush2.bf16.msra.mxu0 0
  %467 = vmatprep.subr.bf16.mxu0 0
  %468 = vmatpush2.bf16.msra.mxu0 0
  %469 = vmatprep.subr.bf16.mxu0 0
  %470 = vmatpush2.bf16.msra.mxu0 0
  %471 = vmatprep.mubr.bf16.mxu0 0
  %472 = vmatmul.mubr.bf16.gmra.mxu0 %v357
  %v473 = vpop.f32.mrf.mxu0
  %v474 = vadd.f32 %v434, %v473
  %v475 = vpop.f32.mrf.mxu0
  %v476 = vpop.f32.mrf.mxu0
  %v477 = vpop.f32.mrf.mxu0
  %478 = vdwg.mxu0
  %v479 = vmax.f32 %v474, 0.0
  %v480 = vpack.c.bf16 %v479, %v479
  %481 = vst [vmem:[%s3] sm:$0x1] %v480
  // Predicated region
  $region14: #{nature_cnn_forward.6} parent=0 // pred_check
    _
  $region15: #{nature_cnn_forward.6} parent=0 // pred_check_branch
    %483 = sbr.rel (0) target = $region17
  $region16: #{nature_cnn_forward.6} parent=0 // pred_region
    _
  $region17: #{nature_cnn_forward.6} parent=0 // pred_fallthru
    _
  // Predicated region
  $region18: #{nature_cnn_forward.6} parent=0 // pred_check
    _
  $region19: #{nature_cnn_forward.6} parent=0 // pred_check_branch
    %485 = sbr.rel (0) target = $region21
  $region20: #{nature_cnn_forward.6} parent=0 // pred_region
    _
  $region21: #{nature_cnn_forward.6} parent=0 // pred_fallthru
    _

// kernel: nature_cnn_forward.7
$region0: #{nature_cnn_forward.7}
  #allocation0 [shape = 'u32[]', space=smem, size = 0x4, offset = 0x4, fixed_abs, tag = 'smem constant byte address 0x4 - core index']
  #allocation1 [shape = 'u32[144,128]{1,0:T(1,128)}', space=vmem, size = 0x12000, scoped, tag = 'internal scratch']
  %s0 = inlined_call_operand.vmem [shape: bf16[2,128], index: 0, kind: input, shape index: {}]
  %s1 = inlined_call_operand.vmem [shape: bf16[128,128], index: 1, kind: input, shape index: {}]
  %s2 = inlined_call_operand.vmem [shape: f32[1,128], index: 2, kind: input, shape index: {}]
  %s3 = inlined_call_operand.hbm [shape: f32[2,128], index: 3, kind: output, shape index: {}]
  %s4 = sld [smem:[#allocation0]]
  $region22: #{nature_cnn_forward.7} parent=0
    _
  %s6 = ssub.s32 1, %s4
  %s7 = scalar_select 0, %s6, %s4
  $region1: #{nature_cnn_forward.7} parent=0
    #allocation2 [shape = 'u8[1024]{0}', space=vmem, size = 0x400, scoped, tag = 'output window, operand 0, single buffered']
    #allocation3 [shape = 's32[1]{0}', space=sflag, size = 0x4, scoped, tag = 'scoped memory for nature_cnn_forward.7']
    %8 = vsyncpa [#allocation3], 0
    // Predicated region
    $region2: #{nature_cnn_forward.7} parent=1 // pred_check
      _
    $region3: #{nature_cnn_forward.7} parent=1 // pred_check_branch
      %10 = sbr.rel (0) target = $region5
    $region4: #{nature_cnn_forward.7} parent=1 // pred_region
      _
    $region5: #{nature_cnn_forward.7} parent=1 // pred_fallthru
      _
    // Predicated region
    $region6: #{nature_cnn_forward.7} parent=1 // pred_check
      _
    $region7: #{nature_cnn_forward.7} parent=1 // pred_check_branch
      %12 = sbr.rel (0) target = $region9
    $region8: #{nature_cnn_forward.7} parent=1 // pred_region
      _
    $region9: #{nature_cnn_forward.7} parent=1 // pred_fallthru
      _
    // Predicated region
    $region10: #{nature_cnn_forward.7} parent=1 // pred_check
      _
    $region11: #{nature_cnn_forward.7} parent=1 // pred_check_branch
      %14 = sbr.rel (0) target = $region13
    $region12: #{nature_cnn_forward.7} parent=1 // pred_region
      _
    $region13: #{nature_cnn_forward.7} parent=1 // pred_fallthru
      _
    %v16 = vld [vmem:[%s0] sm:$0x1]
    %v17 = vld [vmem:[%s1] sm:$0xf]
    %v18 = vld [vmem:[%s1 + $0x4] sm:$0xf]
    %v19 = vld [vmem:[%s1 + $0x8] sm:$0xf]
    %v20 = vld [vmem:[%s1 + $0xc] sm:$0xf]
    %v21 = vld [vmem:[%s1 + $0x10] sm:$0xf]
    %v22 = vld [vmem:[%s1 + $0x14] sm:$0xf]
    %v23 = vld [vmem:[%s1 + $0x18] sm:$0xf]
    %v24 = vld [vmem:[%s1 + $0x1c] sm:$0xf]
    %v25 = vld [vmem:[%s1 + $0x20] sm:$0xf]
    %v26 = vld [vmem:[%s1 + $0x24] sm:$0xf]
    %v27 = vld [vmem:[%s1 + $0x28] sm:$0xf]
    %v28 = vld [vmem:[%s1 + $0x2c] sm:$0xf]
    %v29 = vld [vmem:[%s1 + $0x30] sm:$0xf]
    %v30 = vld [vmem:[%s1 + $0x34] sm:$0xf]
    %v31 = vld [vmem:[%s1 + $0x38] sm:$0xf]
    %v32 = vld [vmem:[%s1 + $0x3c] sm:$0xf]
    %v33 = vld [vmem:[%s2] sm:$0x1]
    %v35 = vlaneseq
    %v36 = vshrl.u32 %v35, 7
    %v37 = vsub.s32 0, %v36
    %v38 = vrot.slane %v33, %v37
    %v56 = vunpack.c.l.b16 %v17
    %v57 = vunpack.c.l.b16 %v18
    %v58 = vunpack.c.l.b16 %v19
    %v59 = vunpack.c.l.b16 %v20
    %v60 = vunpack.c.l.b16 %v21
    %v61 = vunpack.c.l.b16 %v22
    %v62 = vunpack.c.l.b16 %v23
    %v63 = vunpack.c.l.b16 %v24
    %v64 = vunpack.c.l.b16 %v25
    %v65 = vunpack.c.l.b16 %v26
    %v66 = vunpack.c.l.b16 %v27
    %v67 = vunpack.c.l.b16 %v28
    %v68 = vunpack.c.l.b16 %v29
    %v69 = vunpack.c.l.b16 %v30
    %v70 = vunpack.c.l.b16 %v31
    %v71 = vunpack.c.l.b16 %v32
    %v72 = vpack.c.b16 %v57, %v56
    %v73 = vpack.c.b16 %v59, %v58
    %v74 = vpack.c.b16 %v61, %v60
    %v75 = vpack.c.b16 %v63, %v62
    %v76 = vpack.c.b16 %v65, %v64
    %v77 = vpack.c.b16 %v67, %v66
    %v78 = vpack.c.b16 %v69, %v68
    %v79 = vpack.c.b16 %v71, %v70
    %88 = vmatprep.subr.bf16.mxu0 0
    %89 = vmatpush1.bf16.msra.mxu0 %v79
    %90 = vmatprep.subr.bf16.mxu0 0
    %91 = vmatpush1.bf16.msra.mxu0 %v78
    %92 = vmatprep.subr.bf16.mxu0 0
    %93 = vmatpush1.bf16.msra.mxu0 %v77
    %94 = vmatprep.subr.bf16.mxu0 0
    %95 = vmatpush1.bf16.msra.mxu0 %v76
    %96 = vmatprep.subr.bf16.mxu0 0
    %97 = vmatpush1.bf16.msra.mxu0 %v75
    %98 = vmatprep.subr.bf16.mxu0 0
    %99 = vmatpush1.bf16.msra.mxu0 %v74
    %100 = vmatprep.subr.bf16.mxu0 0
    %101 = vmatpush1.bf16.msra.mxu0 %v73
    %102 = vmatprep.subr.bf16.mxu0 0
    %103 = vmatpush1.bf16.msra.mxu0 %v72
    %104 = vmatprep.subr.bf16.mxu0 0
    %105 = vmatpush2.bf16.msra.mxu0 0
    %106 = vmatprep.subr.bf16.mxu0 0
    %107 = vmatpush2.bf16.msra.mxu0 0
    %108 = vmatprep.subr.bf16.mxu0 0
    %109 = vmatpush2.bf16.msra.mxu0 0
    %110 = vmatprep.subr.bf16.mxu0 0
    %111 = vmatpush2.bf16.msra.mxu0 0
    %112 = vmatprep.subr.bf16.mxu0 0
    %113 = vmatpush2.bf16.msra.mxu0 0
    %114 = vmatprep.subr.bf16.mxu0 0
    %115 = vmatpush2.bf16.msra.mxu0 0
    %116 = vmatprep.subr.bf16.mxu0 0
    %117 = vmatpush2.bf16.msra.mxu0 0
    %118 = vmatprep.subr.bf16.mxu0 0
    %119 = vmatpush2.bf16.msra.mxu0 0
    %120 = vmatprep.mubr.bf16.mxu0 0
    %121 = vmatmul.mubr.bf16.gmra.mxu0 %v16
    %v122 = vpop.f32.mrf.mxu0
    %v123 = vadd.f32 %v38, %v122
    %v124 = vpop.f32.mrf.mxu0
    %v125 = vpop.f32.mrf.mxu0
    %v126 = vpop.f32.mrf.mxu0
    %127 = vdwg.mxu0
    %v128 = vmax.f32 %v123, 0.0
    %129 = vst [vmem:[#allocation2] sm:$0x3] %v128
    // Predicated region
    $region14: #{nature_cnn_forward.7} parent=1 // pred_check
      _
    $region15: #{nature_cnn_forward.7} parent=1 // pred_check_branch
      %131 = sbr.rel (0) target = $region17
    $region16: #{nature_cnn_forward.7} parent=1 // pred_region
      %s133 = ssub.s32 32, 32
      %134 = vsyncadd [#allocation3], %s133
      %s136 = sshll.u32 [#allocation2], 4
      %s137 = int_to_ptr.vmem [resolvable:$true] %s136
      %139 = dma.vmem_to_hbm [thread:$0]  %s137, 32, %s3, [#allocation3]
    $region17: #{nature_cnn_forward.7} parent=1 // pred_fallthru
      _
    // Predicated region
    $region18: #{nature_cnn_forward.7} parent=1 // pred_check
      _
    $region19: #{nature_cnn_forward.7} parent=1 // pred_check_branch
      %141 = sbr.rel (0) target = $region21
    $region20: #{nature_cnn_forward.7} parent=1 // pred_region
      %142 = dma.done [#allocation3], 32
    $region21: #{nature_cnn_forward.7} parent=1 // pred_fallthru
      _
    %143 = vsyncpa [#allocation3], 1

</llo_original>
